<compile_context>
chip_gen: v7x
topology: tpu7x:2x2x1
jax: 0.10.0
libtpu: 0.0.40
codegen_flags: <defaults>
</compile_context>

<pallas_src>
import jax
import jax.numpy as jnp
from jax.experimental import pallas as pl
from jax.experimental.pallas import tpu as pltpu


def _make_text_supervision_kernel(TB: int, S: int, D: int, G_per: int):
    inv_s = 1.0 / float(S)

    def kernel(ids_ref, emb_hbm, out_ref, row_buf, sems):
        # ids_ref : SMEM (B_pad * S,) int32    -- scalar-prefetched, flattened token ids
        # emb_hbm : HBM  (V, D)                -- memory_space=pl.ANY (never auto-DMA'd)
        # out_ref : VMEM (1, TB, D) float32    -- per-step mean rows (no Q broadcast here)
        # row_buf : VMEM (2, TB, S, D)         -- double-buffered gathered embedding rows
        # sems    : DMA semaphores (2,)        -- one per buffer slot
        c = pl.program_id(0)   # chunk axis ("parallel": may be split across TensorCores)
        i = pl.program_id(1)   # step within chunk ("arbitrary": sequential, carries pipeline)

        def issue_gather(step, slot):
            # Issue one row-gather DMA per token of the TB rows of `step`.
            # Statically unrolled; all copies are in flight concurrently and all
            # SMEM id reads happen before any wait below.
            base = step * (TB * S)
            for t in range(TB):
                for s in range(S):
                    tok = ids_ref[base + t * S + s]
                    pltpu.make_async_copy(
                        emb_hbm.at[pl.ds(tok, 1), :],           # (1, D) row in HBM
                        row_buf.at[slot, t, pl.ds(s, 1), :],    # (1, D) slot in VMEM
                        sems.at[slot],
                    ).start()

        # Prime the pipeline on this chunk's first step.
        @pl.when(i == 0)
        def _():
            issue_gather(c * G_per, 0)

        # Prefetch the next step's rows into the other slot (ids are already in
        # SMEM), hiding the HBM gather latency behind this step's reduce + store.
        if G_per > 1:
            @pl.when(i + 1 < G_per)
            def _():
                issue_gather(c * G_per + i + 1, (i + 1) % 2)

        # Wait for this step's rows.  Per-copy waits exactly mirror the issued
        # copies (identical (1, D) sizes), so the per-slot semaphore balances.
        slot = i % 2
        size_src = emb_hbm.at[pl.ds(0, 1), :]   # size-only placeholder source
        for t in range(TB):
            for s in range(S):
                pltpu.make_async_copy(
                    size_src,
                    row_buf.at[slot, t, pl.ds(s, 1), :],
                    sems.at[slot],
                ).wait()

        # Sequence mean with f32 accumulation (no explicit full f32 copy of the
        # staging buffer).
        rows = row_buf[slot]                                       # (TB, S, D)
        mean = jnp.sum(rows, axis=1, dtype=jnp.float32) * inv_s    # (TB, D)
        out_ref[...] = mean[None].astype(out_ref.dtype)            # (1, TB, D)

    return kernel


def text_supervision(token_ids: jax.Array, embedding: jax.Array,
                     num_queries: int = 16, *, block_rows: int = 8) -> jax.Array:
    """token_ids: (B, S) int; embedding: (V, D) [f32 or bf16] -> (B, num_queries, D) f32."""
    B, S = token_ids.shape
    V, D = embedding.shape
    Q = int(num_queries)

    # Clamp ids so a bad token can never drive an out-of-bounds DMA.
    token_ids = jnp.clip(token_ids.astype(jnp.int32), 0, V - 1)

    # Batch blocking: TB rows per grid step amortizes per-step overhead; the
    # outer "parallel" chunk axis keeps both v7x TensorCores fed when B >= 2.
    TB = max(1, min(int(block_rows), B // 2 if B >= 2 else 1))
    G = -(-B // TB)                  # number of row-blocks
    NC = 2 if G >= 2 else 1          # chunks (one per TensorCore when possible)
    G_per = -(-G // NC)              # sequential steps per chunk
    B_pad = NC * G_per * TB

    if B_pad > B:
        token_ids = jnp.concatenate(
            [token_ids, jnp.zeros((B_pad - B, S), jnp.int32)], axis=0)

    # 1-D SMEM ids (2-D SMEM would pad the trailing dim to 128 lanes).
    ids_flat = token_ids.reshape(B_pad * S)

    grid_spec = pltpu.PrefetchScalarGridSpec(
        num_scalar_prefetch=1,                      # token_ids -> SMEM
        grid=(NC, G_per),
        in_specs=[
            pl.BlockSpec(memory_space=pl.ANY),      # embedding table stays in HBM
        ],
        out_specs=pl.BlockSpec(
            (1, TB, D), lambda c, i, ids: (c * G_per + i, 0, 0)),
        scratch_shapes=[
            pltpu.VMEM((2, TB, S, D), embedding.dtype),  # double-buffered row gather
            pltpu.SemaphoreType.DMA((2,)),               # one DMA sem per slot
        ],
    )

    mean = pl.pallas_call(
        _make_text_supervision_kernel(TB, S, D, G_per),
        out_shape=jax.ShapeDtypeStruct((NC * G_per, TB, D), jnp.float32),
        grid_spec=grid_spec,
        compiler_params=pltpu.CompilerParams(
            dimension_semantics=("parallel", "arbitrary"),
        ),
    )(ids_flat, embedding)

    mean = mean.reshape(B_pad, D)[:B]                       # drop padded rows
    # expand(-1, Q, -1): Q-fold broadcast done lazily outside the kernel so the
    # kernel's HBM writeback is Q x smaller.
    return jnp.broadcast_to(mean[:, None, :], (B, Q, D))


if __name__ == "__main__":
    # Small, deterministic synthetic shapes consistent with the module's forward
    # (CLIP uses S=77, V=49408, D=512; scaled down here).  block_rows=2 makes the
    # demo exercise batch blocking, both buffer slots, the cross-step prefetch,
    # the chunk axis, and batch padding.
    B = 6            # number of text strings
    S = 8            # context length
    V = 512          # vocab size
    D = 128          # transformer width / embedding dim
    NUM_QUERIES = 16

    key = jax.random.PRNGKey(0)
    k_emb, k_ids = jax.random.split(key)

    # Deterministic "token_embedding.weight" init (CLIP uses normal(std=0.02)).
    embedding = 0.02 * jax.random.normal(k_emb, (V, D), dtype=jnp.float32)
    # Deterministic pre-tokenized text ids (stand-in for clip.tokenize output).
    token_ids = jax.random.randint(k_ids, (B, S), 0, V, dtype=jnp.int32)

    out = text_supervision(token_ids, embedding, NUM_QUERIES, block_rows=2)
    out = jax.block_until_ready(out)

    # Pure-JAX reference of the forward pass semantics.
    ref = embedding[token_ids]                                # (B, S, D)
    ref = ref.mean(axis=1, keepdims=True)                     # (B, 1, D)
    ref = jnp.broadcast_to(ref, (B, NUM_QUERIES, D))          # expand(-1, Q, -1)

    assert out.shape == (B, NUM_QUERIES, D), out.shape
    assert jnp.allclose(out, ref, atol=1e-5, rtol=1e-5)

    print("KERNEL_OK")
</pallas_src>

<mosaic_0001>
module attributes {stable_mosaic.version = 11 : i64} {
  func.func @kernel(%arg0: i32, %arg1: i32, %arg2: memref<64xi32, #tpu.memory_space<smem>>, %arg3: memref<512x128xf32, #tpu.memory_space<any>>, %arg4: memref<1x2x128xf32, #tpu.memory_space<vmem>>, %arg5: memref<2x2x8x128xf32, #tpu.memory_space<vmem>>, %arg6: memref<2x!tpu.dma_semaphore, #tpu.memory_space<semaphore_mem>>) attributes {dimension_semantics = [#tpu.dimension_semantics<parallel>, #tpu.dimension_semantics<arbitrary>], iteration_bounds = array<i64: 2, 2>, scalar_prefetch = 1 : i64, scratch_operands = 2 : i64, tpu.core_type = #tpu.core_type<tc>, window_params = [{}, {transform_indices = @transform_1, window_bounds = array<i64: 1, 2, 128>}]} {
    %c0_i32 = arith.constant 0 : i32
    %0 = arith.cmpi eq, %arg1, %c0_i32 : i32
    %1 = arith.extui %0 : i1 to i32
    %c0_i32_0 = arith.constant 0 : i32
    %2 = arith.cmpi ne, %1, %c0_i32_0 : i32
    scf.if %2 {
      %c2_i32_89 = arith.constant 2 : i32
      %105 = arith.muli %arg0, %c2_i32_89 : i32
      %c16_i32 = arith.constant 16 : i32
      %106 = arith.muli %105, %c16_i32 : i32
      %c0_i32_90 = arith.constant 0 : i32
      %107 = arith.addi %106, %c0_i32_90 : i32
      %c0_i32_91 = arith.constant 0 : i32
      %108 = arith.addi %107, %c0_i32_91 : i32
      %109 = arith.index_cast %108 : i32 to index
      %110 = memref.load %arg2[%109] : memref<64xi32, #tpu.memory_space<smem>>
      %c0_i32_92 = arith.constant 0 : i32
      %c0_i32_93 = arith.constant 0 : i32
      %c0_i32_94 = arith.constant 0 : i32
      %c0_i32_95 = arith.constant 0 : i32
      %111 = tpu.memref_slice %arg3[%110, %c0_i32_95] : memref<512x128xf32, #tpu.memory_space<any>> -> memref<1x128xf32, #tpu.memory_space<any>>
      %c0_i32_96 = arith.constant 0 : i32
      %c0_i32_97 = arith.constant 0 : i32
      %112 = tpu.memref_slice %arg5[%c0_i32_92, %c0_i32_93, %c0_i32_96, %c0_i32_97] : memref<2x2x8x128xf32, #tpu.memory_space<vmem>> -> memref<1x1x1x128xf32, #tpu.memory_space<vmem>>
      %113 = tpu.memref_squeeze %112 : memref<1x1x1x128xf32, #tpu.memory_space<vmem>> -> memref<1x128xf32, #tpu.memory_space<vmem>>
      %114 = tpu.memref_slice %arg6[%c0_i32_94] : memref<2x!tpu.dma_semaphore, #tpu.memory_space<semaphore_mem>> -> memref<1x!tpu.dma_semaphore, #tpu.memory_space<semaphore_mem>>
      %115 = tpu.memref_squeeze %114 : memref<1x!tpu.dma_semaphore, #tpu.memory_space<semaphore_mem>> -> memref<!tpu.dma_semaphore, #tpu.memory_space<semaphore_mem>>
      tpu.enqueue_dma source(%111 : memref<1x128xf32, #tpu.memory_space<any>>) target(%113 : memref<1x128xf32, #tpu.memory_space<vmem>>) target_semaphore(%115 : memref<!tpu.dma_semaphore, #tpu.memory_space<semaphore_mem>>)
      %c0_i32_98 = arith.constant 0 : i32
      %116 = arith.addi %106, %c0_i32_98 : i32
      %c1_i32_99 = arith.constant 1 : i32
      %117 = arith.addi %116, %c1_i32_99 : i32
      %118 = arith.index_cast %117 : i32 to index
      %119 = memref.load %arg2[%118] : memref<64xi32, #tpu.memory_space<smem>>
      %c0_i32_100 = arith.constant 0 : i32
      %c0_i32_101 = arith.constant 0 : i32
      %c0_i32_102 = arith.constant 0 : i32
      %c0_i32_103 = arith.constant 0 : i32
      %120 = tpu.memref_slice %arg3[%119, %c0_i32_103] : memref<512x128xf32, #tpu.memory_space<any>> -> memref<1x128xf32, #tpu.memory_space<any>>
      %c1_i32_104 = arith.constant 1 : i32
      %c0_i32_105 = arith.constant 0 : i32
      %121 = tpu.memref_slice %arg5[%c0_i32_100, %c0_i32_101, %c1_i32_104, %c0_i32_105] : memref<2x2x8x128xf32, #tpu.memory_space<vmem>> -> memref<1x1x1x128xf32, #tpu.memory_space<vmem>>
      %122 = tpu.memref_squeeze %121 : memref<1x1x1x128xf32, #tpu.memory_space<vmem>> -> memref<1x128xf32, #tpu.memory_space<vmem>>
      %123 = tpu.memref_slice %arg6[%c0_i32_102] : memref<2x!tpu.dma_semaphore, #tpu.memory_space<semaphore_mem>> -> memref<1x!tpu.dma_semaphore, #tpu.memory_space<semaphore_mem>>
      %124 = tpu.memref_squeeze %123 : memref<1x!tpu.dma_semaphore, #tpu.memory_space<semaphore_mem>> -> memref<!tpu.dma_semaphore, #tpu.memory_space<semaphore_mem>>
      tpu.enqueue_dma source(%120 : memref<1x128xf32, #tpu.memory_space<any>>) target(%122 : memref<1x128xf32, #tpu.memory_space<vmem>>) target_semaphore(%124 : memref<!tpu.dma_semaphore, #tpu.memory_space<semaphore_mem>>)
      %c0_i32_106 = arith.constant 0 : i32
      %125 = arith.addi %106, %c0_i32_106 : i32
      %c2_i32_107 = arith.constant 2 : i32
      %126 = arith.addi %125, %c2_i32_107 : i32
      %127 = arith.index_cast %126 : i32 to index
      %128 = memref.load %arg2[%127] : memref<64xi32, #tpu.memory_space<smem>>
      %c0_i32_108 = arith.constant 0 : i32
      %c0_i32_109 = arith.constant 0 : i32
      %c0_i32_110 = arith.constant 0 : i32
      %c0_i32_111 = arith.constant 0 : i32
      %129 = tpu.memref_slice %arg3[%128, %c0_i32_111] : memref<512x128xf32, #tpu.memory_space<any>> -> memref<1x128xf32, #tpu.memory_space<any>>
      %c2_i32_112 = arith.constant 2 : i32
      %c0_i32_113 = arith.constant 0 : i32
      %130 = tpu.memref_slice %arg5[%c0_i32_108, %c0_i32_109, %c2_i32_112, %c0_i32_113] : memref<2x2x8x128xf32, #tpu.memory_space<vmem>> -> memref<1x1x1x128xf32, #tpu.memory_space<vmem>>
      %131 = tpu.memref_squeeze %130 : memref<1x1x1x128xf32, #tpu.memory_space<vmem>> -> memref<1x128xf32, #tpu.memory_space<vmem>>
      %132 = tpu.memref_slice %arg6[%c0_i32_110] : memref<2x!tpu.dma_semaphore, #tpu.memory_space<semaphore_mem>> -> memref<1x!tpu.dma_semaphore, #tpu.memory_space<semaphore_mem>>
      %133 = tpu.memref_squeeze %132 : memref<1x!tpu.dma_semaphore, #tpu.memory_space<semaphore_mem>> -> memref<!tpu.dma_semaphore, #tpu.memory_space<semaphore_mem>>
      tpu.enqueue_dma source(%129 : memref<1x128xf32, #tpu.memory_space<any>>) target(%131 : memref<1x128xf32, #tpu.memory_space<vmem>>) target_semaphore(%133 : memref<!tpu.dma_semaphore, #tpu.memory_space<semaphore_mem>>)
      %c0_i32_114 = arith.constant 0 : i32
      %134 = arith.addi %106, %c0_i32_114 : i32
      %c3_i32_115 = arith.constant 3 : i32
      %135 = arith.addi %134, %c3_i32_115 : i32
      %136 = arith.index_cast %135 : i32 to index
      %137 = memref.load %arg2[%136] : memref<64xi32, #tpu.memory_space<smem>>
      %c0_i32_116 = arith.constant 0 : i32
      %c0_i32_117 = arith.constant 0 : i32
      %c0_i32_118 = arith.constant 0 : i32
      %c0_i32_119 = arith.constant 0 : i32
      %138 = tpu.memref_slice %arg3[%137, %c0_i32_119] : memref<512x128xf32, #tpu.memory_space<any>> -> memref<1x128xf32, #tpu.memory_space<any>>
      %c3_i32_120 = arith.constant 3 : i32
      %c0_i32_121 = arith.constant 0 : i32
      %139 = tpu.memref_slice %arg5[%c0_i32_116, %c0_i32_117, %c3_i32_120, %c0_i32_121] : memref<2x2x8x128xf32, #tpu.memory_space<vmem>> -> memref<1x1x1x128xf32, #tpu.memory_space<vmem>>
      %140 = tpu.memref_squeeze %139 : memref<1x1x1x128xf32, #tpu.memory_space<vmem>> -> memref<1x128xf32, #tpu.memory_space<vmem>>
      %141 = tpu.memref_slice %arg6[%c0_i32_118] : memref<2x!tpu.dma_semaphore, #tpu.memory_space<semaphore_mem>> -> memref<1x!tpu.dma_semaphore, #tpu.memory_space<semaphore_mem>>
      %142 = tpu.memref_squeeze %141 : memref<1x!tpu.dma_semaphore, #tpu.memory_space<semaphore_mem>> -> memref<!tpu.dma_semaphore, #tpu.memory_space<semaphore_mem>>
      tpu.enqueue_dma source(%138 : memref<1x128xf32, #tpu.memory_space<any>>) target(%140 : memref<1x128xf32, #tpu.memory_space<vmem>>) target_semaphore(%142 : memref<!tpu.dma_semaphore, #tpu.memory_space<semaphore_mem>>)
      %c0_i32_122 = arith.constant 0 : i32
      %143 = arith.addi %106, %c0_i32_122 : i32
      %c4_i32_123 = arith.constant 4 : i32
      %144 = arith.addi %143, %c4_i32_123 : i32
      %145 = arith.index_cast %144 : i32 to index
      %146 = memref.load %arg2[%145] : memref<64xi32, #tpu.memory_space<smem>>
      %c0_i32_124 = arith.constant 0 : i32
      %c0_i32_125 = arith.constant 0 : i32
      %c0_i32_126 = arith.constant 0 : i32
      %c0_i32_127 = arith.constant 0 : i32
      %147 = tpu.memref_slice %arg3[%146, %c0_i32_127] : memref<512x128xf32, #tpu.memory_space<any>> -> memref<1x128xf32, #tpu.memory_space<any>>
      %c4_i32_128 = arith.constant 4 : i32
      %c0_i32_129 = arith.constant 0 : i32
      %148 = tpu.memref_slice %arg5[%c0_i32_124, %c0_i32_125, %c4_i32_128, %c0_i32_129] : memref<2x2x8x128xf32, #tpu.memory_space<vmem>> -> memref<1x1x1x128xf32, #tpu.memory_space<vmem>>
      %149 = tpu.memref_squeeze %148 : memref<1x1x1x128xf32, #tpu.memory_space<vmem>> -> memref<1x128xf32, #tpu.memory_space<vmem>>
      %150 = tpu.memref_slice %arg6[%c0_i32_126] : memref<2x!tpu.dma_semaphore, #tpu.memory_space<semaphore_mem>> -> memref<1x!tpu.dma_semaphore, #tpu.memory_space<semaphore_mem>>
      %151 = tpu.memref_squeeze %150 : memref<1x!tpu.dma_semaphore, #tpu.memory_space<semaphore_mem>> -> memref<!tpu.dma_semaphore, #tpu.memory_space<semaphore_mem>>
      tpu.enqueue_dma source(%147 : memref<1x128xf32, #tpu.memory_space<any>>) target(%149 : memref<1x128xf32, #tpu.memory_space<vmem>>) target_semaphore(%151 : memref<!tpu.dma_semaphore, #tpu.memory_space<semaphore_mem>>)
      %c0_i32_130 = arith.constant 0 : i32
      %152 = arith.addi %106, %c0_i32_130 : i32
      %c5_i32_131 = arith.constant 5 : i32
      %153 = arith.addi %152, %c5_i32_131 : i32
      %154 = arith.index_cast %153 : i32 to index
      %155 = memref.load %arg2[%154] : memref<64xi32, #tpu.memory_space<smem>>
      %c0_i32_132 = arith.constant 0 : i32
      %c0_i32_133 = arith.constant 0 : i32
      %c0_i32_134 = arith.constant 0 : i32
      %c0_i32_135 = arith.constant 0 : i32
      %156 = tpu.memref_slice %arg3[%155, %c0_i32_135] : memref<512x128xf32, #tpu.memory_space<any>> -> memref<1x128xf32, #tpu.memory_space<any>>
      %c5_i32_136 = arith.constant 5 : i32
      %c0_i32_137 = arith.constant 0 : i32
      %157 = tpu.memref_slice %arg5[%c0_i32_132, %c0_i32_133, %c5_i32_136, %c0_i32_137] : memref<2x2x8x128xf32, #tpu.memory_space<vmem>> -> memref<1x1x1x128xf32, #tpu.memory_space<vmem>>
      %158 = tpu.memref_squeeze %157 : memref<1x1x1x128xf32, #tpu.memory_space<vmem>> -> memref<1x128xf32, #tpu.memory_space<vmem>>
      %159 = tpu.memref_slice %arg6[%c0_i32_134] : memref<2x!tpu.dma_semaphore, #tpu.memory_space<semaphore_mem>> -> memref<1x!tpu.dma_semaphore, #tpu.memory_space<semaphore_mem>>
      %160 = tpu.memref_squeeze %159 : memref<1x!tpu.dma_semaphore, #tpu.memory_space<semaphore_mem>> -> memref<!tpu.dma_semaphore, #tpu.memory_space<semaphore_mem>>
      tpu.enqueue_dma source(%156 : memref<1x128xf32, #tpu.memory_space<any>>) target(%158 : memref<1x128xf32, #tpu.memory_space<vmem>>) target_semaphore(%160 : memref<!tpu.dma_semaphore, #tpu.memory_space<semaphore_mem>>)
      %c0_i32_138 = arith.constant 0 : i32
      %161 = arith.addi %106, %c0_i32_138 : i32
      %c6_i32_139 = arith.constant 6 : i32
      %162 = arith.addi %161, %c6_i32_139 : i32
      %163 = arith.index_cast %162 : i32 to index
      %164 = memref.load %arg2[%163] : memref<64xi32, #tpu.memory_space<smem>>
      %c0_i32_140 = arith.constant 0 : i32
      %c0_i32_141 = arith.constant 0 : i32
      %c0_i32_142 = arith.constant 0 : i32
      %c0_i32_143 = arith.constant 0 : i32
      %165 = tpu.memref_slice %arg3[%164, %c0_i32_143] : memref<512x128xf32, #tpu.memory_space<any>> -> memref<1x128xf32, #tpu.memory_space<any>>
      %c6_i32_144 = arith.constant 6 : i32
      %c0_i32_145 = arith.constant 0 : i32
      %166 = tpu.memref_slice %arg5[%c0_i32_140, %c0_i32_141, %c6_i32_144, %c0_i32_145] : memref<2x2x8x128xf32, #tpu.memory_space<vmem>> -> memref<1x1x1x128xf32, #tpu.memory_space<vmem>>
      %167 = tpu.memref_squeeze %166 : memref<1x1x1x128xf32, #tpu.memory_space<vmem>> -> memref<1x128xf32, #tpu.memory_space<vmem>>
      %168 = tpu.memref_slice %arg6[%c0_i32_142] : memref<2x!tpu.dma_semaphore, #tpu.memory_space<semaphore_mem>> -> memref<1x!tpu.dma_semaphore, #tpu.memory_space<semaphore_mem>>
      %169 = tpu.memref_squeeze %168 : memref<1x!tpu.dma_semaphore, #tpu.memory_space<semaphore_mem>> -> memref<!tpu.dma_semaphore, #tpu.memory_space<semaphore_mem>>
      tpu.enqueue_dma source(%165 : memref<1x128xf32, #tpu.memory_space<any>>) target(%167 : memref<1x128xf32, #tpu.memory_space<vmem>>) target_semaphore(%169 : memref<!tpu.dma_semaphore, #tpu.memory_space<semaphore_mem>>)
      %c0_i32_146 = arith.constant 0 : i32
      %170 = arith.addi %106, %c0_i32_146 : i32
      %c7_i32_147 = arith.constant 7 : i32
      %171 = arith.addi %170, %c7_i32_147 : i32
      %172 = arith.index_cast %171 : i32 to index
      %173 = memref.load %arg2[%172] : memref<64xi32, #tpu.memory_space<smem>>
      %c0_i32_148 = arith.constant 0 : i32
      %c0_i32_149 = arith.constant 0 : i32
      %c0_i32_150 = arith.constant 0 : i32
      %c0_i32_151 = arith.constant 0 : i32
      %174 = tpu.memref_slice %arg3[%173, %c0_i32_151] : memref<512x128xf32, #tpu.memory_space<any>> -> memref<1x128xf32, #tpu.memory_space<any>>
      %c7_i32_152 = arith.constant 7 : i32
      %c0_i32_153 = arith.constant 0 : i32
      %175 = tpu.memref_slice %arg5[%c0_i32_148, %c0_i32_149, %c7_i32_152, %c0_i32_153] : memref<2x2x8x128xf32, #tpu.memory_space<vmem>> -> memref<1x1x1x128xf32, #tpu.memory_space<vmem>>
      %176 = tpu.memref_squeeze %175 : memref<1x1x1x128xf32, #tpu.memory_space<vmem>> -> memref<1x128xf32, #tpu.memory_space<vmem>>
      %177 = tpu.memref_slice %arg6[%c0_i32_150] : memref<2x!tpu.dma_semaphore, #tpu.memory_space<semaphore_mem>> -> memref<1x!tpu.dma_semaphore, #tpu.memory_space<semaphore_mem>>
      %178 = tpu.memref_squeeze %177 : memref<1x!tpu.dma_semaphore, #tpu.memory_space<semaphore_mem>> -> memref<!tpu.dma_semaphore, #tpu.memory_space<semaphore_mem>>
      tpu.enqueue_dma source(%174 : memref<1x128xf32, #tpu.memory_space<any>>) target(%176 : memref<1x128xf32, #tpu.memory_space<vmem>>) target_semaphore(%178 : memref<!tpu.dma_semaphore, #tpu.memory_space<semaphore_mem>>)
      %c8_i32 = arith.constant 8 : i32
      %179 = arith.addi %106, %c8_i32 : i32
      %c0_i32_154 = arith.constant 0 : i32
      %180 = arith.addi %179, %c0_i32_154 : i32
      %181 = arith.index_cast %180 : i32 to index
      %182 = memref.load %arg2[%181] : memref<64xi32, #tpu.memory_space<smem>>
      %c0_i32_155 = arith.constant 0 : i32
      %c1_i32_156 = arith.constant 1 : i32
      %c0_i32_157 = arith.constant 0 : i32
      %c0_i32_158 = arith.constant 0 : i32
      %183 = tpu.memref_slice %arg3[%182, %c0_i32_158] : memref<512x128xf32, #tpu.memory_space<any>> -> memref<1x128xf32, #tpu.memory_space<any>>
      %c0_i32_159 = arith.constant 0 : i32
      %c0_i32_160 = arith.constant 0 : i32
      %184 = tpu.memref_slice %arg5[%c0_i32_155, %c1_i32_156, %c0_i32_159, %c0_i32_160] : memref<2x2x8x128xf32, #tpu.memory_space<vmem>> -> memref<1x1x1x128xf32, #tpu.memory_space<vmem>>
      %185 = tpu.memref_squeeze %184 : memref<1x1x1x128xf32, #tpu.memory_space<vmem>> -> memref<1x128xf32, #tpu.memory_space<vmem>>
      %186 = tpu.memref_slice %arg6[%c0_i32_157] : memref<2x!tpu.dma_semaphore, #tpu.memory_space<semaphore_mem>> -> memref<1x!tpu.dma_semaphore, #tpu.memory_space<semaphore_mem>>
      %187 = tpu.memref_squeeze %186 : memref<1x!tpu.dma_semaphore, #tpu.memory_space<semaphore_mem>> -> memref<!tpu.dma_semaphore, #tpu.memory_space<semaphore_mem>>
      tpu.enqueue_dma source(%183 : memref<1x128xf32, #tpu.memory_space<any>>) target(%185 : memref<1x128xf32, #tpu.memory_space<vmem>>) target_semaphore(%187 : memref<!tpu.dma_semaphore, #tpu.memory_space<semaphore_mem>>)
      %c8_i32_161 = arith.constant 8 : i32
      %188 = arith.addi %106, %c8_i32_161 : i32
      %c1_i32_162 = arith.constant 1 : i32
      %189 = arith.addi %188, %c1_i32_162 : i32
      %190 = arith.index_cast %189 : i32 to index
      %191 = memref.load %arg2[%190] : memref<64xi32, #tpu.memory_space<smem>>
      %c0_i32_163 = arith.constant 0 : i32
      %c1_i32_164 = arith.constant 1 : i32
      %c0_i32_165 = arith.constant 0 : i32
      %c0_i32_166 = arith.constant 0 : i32
      %192 = tpu.memref_slice %arg3[%191, %c0_i32_166] : memref<512x128xf32, #tpu.memory_space<any>> -> memref<1x128xf32, #tpu.memory_space<any>>
      %c1_i32_167 = arith.constant 1 : i32
      %c0_i32_168 = arith.constant 0 : i32
      %193 = tpu.memref_slice %arg5[%c0_i32_163, %c1_i32_164, %c1_i32_167, %c0_i32_168] : memref<2x2x8x128xf32, #tpu.memory_space<vmem>> -> memref<1x1x1x128xf32, #tpu.memory_space<vmem>>
      %194 = tpu.memref_squeeze %193 : memref<1x1x1x128xf32, #tpu.memory_space<vmem>> -> memref<1x128xf32, #tpu.memory_space<vmem>>
      %195 = tpu.memref_slice %arg6[%c0_i32_165] : memref<2x!tpu.dma_semaphore, #tpu.memory_space<semaphore_mem>> -> memref<1x!tpu.dma_semaphore, #tpu.memory_space<semaphore_mem>>
      %196 = tpu.memref_squeeze %195 : memref<1x!tpu.dma_semaphore, #tpu.memory_space<semaphore_mem>> -> memref<!tpu.dma_semaphore, #tpu.memory_space<semaphore_mem>>
      tpu.enqueue_dma source(%192 : memref<1x128xf32, #tpu.memory_space<any>>) target(%194 : memref<1x128xf32, #tpu.memory_space<vmem>>) target_semaphore(%196 : memref<!tpu.dma_semaphore, #tpu.memory_space<semaphore_mem>>)
      %c8_i32_169 = arith.constant 8 : i32
      %197 = arith.addi %106, %c8_i32_169 : i32
      %c2_i32_170 = arith.constant 2 : i32
      %198 = arith.addi %197, %c2_i32_170 : i32
      %199 = arith.index_cast %198 : i32 to index
      %200 = memref.load %arg2[%199] : memref<64xi32, #tpu.memory_space<smem>>
      %c0_i32_171 = arith.constant 0 : i32
      %c1_i32_172 = arith.constant 1 : i32
      %c0_i32_173 = arith.constant 0 : i32
      %c0_i32_174 = arith.constant 0 : i32
      %201 = tpu.memref_slice %arg3[%200, %c0_i32_174] : memref<512x128xf32, #tpu.memory_space<any>> -> memref<1x128xf32, #tpu.memory_space<any>>
      %c2_i32_175 = arith.constant 2 : i32
      %c0_i32_176 = arith.constant 0 : i32
      %202 = tpu.memref_slice %arg5[%c0_i32_171, %c1_i32_172, %c2_i32_175, %c0_i32_176] : memref<2x2x8x128xf32, #tpu.memory_space<vmem>> -> memref<1x1x1x128xf32, #tpu.memory_space<vmem>>
      %203 = tpu.memref_squeeze %202 : memref<1x1x1x128xf32, #tpu.memory_space<vmem>> -> memref<1x128xf32, #tpu.memory_space<vmem>>
      %204 = tpu.memref_slice %arg6[%c0_i32_173] : memref<2x!tpu.dma_semaphore, #tpu.memory_space<semaphore_mem>> -> memref<1x!tpu.dma_semaphore, #tpu.memory_space<semaphore_mem>>
      %205 = tpu.memref_squeeze %204 : memref<1x!tpu.dma_semaphore, #tpu.memory_space<semaphore_mem>> -> memref<!tpu.dma_semaphore, #tpu.memory_space<semaphore_mem>>
      tpu.enqueue_dma source(%201 : memref<1x128xf32, #tpu.memory_space<any>>) target(%203 : memref<1x128xf32, #tpu.memory_space<vmem>>) target_semaphore(%205 : memref<!tpu.dma_semaphore, #tpu.memory_space<semaphore_mem>>)
      %c8_i32_177 = arith.constant 8 : i32
      %206 = arith.addi %106, %c8_i32_177 : i32
      %c3_i32_178 = arith.constant 3 : i32
      %207 = arith.addi %206, %c3_i32_178 : i32
      %208 = arith.index_cast %207 : i32 to index
      %209 = memref.load %arg2[%208] : memref<64xi32, #tpu.memory_space<smem>>
      %c0_i32_179 = arith.constant 0 : i32
      %c1_i32_180 = arith.constant 1 : i32
      %c0_i32_181 = arith.constant 0 : i32
      %c0_i32_182 = arith.constant 0 : i32
      %210 = tpu.memref_slice %arg3[%209, %c0_i32_182] : memref<512x128xf32, #tpu.memory_space<any>> -> memref<1x128xf32, #tpu.memory_space<any>>
      %c3_i32_183 = arith.constant 3 : i32
      %c0_i32_184 = arith.constant 0 : i32
      %211 = tpu.memref_slice %arg5[%c0_i32_179, %c1_i32_180, %c3_i32_183, %c0_i32_184] : memref<2x2x8x128xf32, #tpu.memory_space<vmem>> -> memref<1x1x1x128xf32, #tpu.memory_space<vmem>>
      %212 = tpu.memref_squeeze %211 : memref<1x1x1x128xf32, #tpu.memory_space<vmem>> -> memref<1x128xf32, #tpu.memory_space<vmem>>
      %213 = tpu.memref_slice %arg6[%c0_i32_181] : memref<2x!tpu.dma_semaphore, #tpu.memory_space<semaphore_mem>> -> memref<1x!tpu.dma_semaphore, #tpu.memory_space<semaphore_mem>>
      %214 = tpu.memref_squeeze %213 : memref<1x!tpu.dma_semaphore, #tpu.memory_space<semaphore_mem>> -> memref<!tpu.dma_semaphore, #tpu.memory_space<semaphore_mem>>
      tpu.enqueue_dma source(%210 : memref<1x128xf32, #tpu.memory_space<any>>) target(%212 : memref<1x128xf32, #tpu.memory_space<vmem>>) target_semaphore(%214 : memref<!tpu.dma_semaphore, #tpu.memory_space<semaphore_mem>>)
      %c8_i32_185 = arith.constant 8 : i32
      %215 = arith.addi %106, %c8_i32_185 : i32
      %c4_i32_186 = arith.constant 4 : i32
      %216 = arith.addi %215, %c4_i32_186 : i32
      %217 = arith.index_cast %216 : i32 to index
      %218 = memref.load %arg2[%217] : memref<64xi32, #tpu.memory_space<smem>>
      %c0_i32_187 = arith.constant 0 : i32
      %c1_i32_188 = arith.constant 1 : i32
      %c0_i32_189 = arith.constant 0 : i32
      %c0_i32_190 = arith.constant 0 : i32
      %219 = tpu.memref_slice %arg3[%218, %c0_i32_190] : memref<512x128xf32, #tpu.memory_space<any>> -> memref<1x128xf32, #tpu.memory_space<any>>
      %c4_i32_191 = arith.constant 4 : i32
      %c0_i32_192 = arith.constant 0 : i32
      %220 = tpu.memref_slice %arg5[%c0_i32_187, %c1_i32_188, %c4_i32_191, %c0_i32_192] : memref<2x2x8x128xf32, #tpu.memory_space<vmem>> -> memref<1x1x1x128xf32, #tpu.memory_space<vmem>>
      %221 = tpu.memref_squeeze %220 : memref<1x1x1x128xf32, #tpu.memory_space<vmem>> -> memref<1x128xf32, #tpu.memory_space<vmem>>
      %222 = tpu.memref_slice %arg6[%c0_i32_189] : memref<2x!tpu.dma_semaphore, #tpu.memory_space<semaphore_mem>> -> memref<1x!tpu.dma_semaphore, #tpu.memory_space<semaphore_mem>>
      %223 = tpu.memref_squeeze %222 : memref<1x!tpu.dma_semaphore, #tpu.memory_space<semaphore_mem>> -> memref<!tpu.dma_semaphore, #tpu.memory_space<semaphore_mem>>
      tpu.enqueue_dma source(%219 : memref<1x128xf32, #tpu.memory_space<any>>) target(%221 : memref<1x128xf32, #tpu.memory_space<vmem>>) target_semaphore(%223 : memref<!tpu.dma_semaphore, #tpu.memory_space<semaphore_mem>>)
      %c8_i32_193 = arith.constant 8 : i32
      %224 = arith.addi %106, %c8_i32_193 : i32
      %c5_i32_194 = arith.constant 5 : i32
      %225 = arith.addi %224, %c5_i32_194 : i32
      %226 = arith.index_cast %225 : i32 to index
      %227 = memref.load %arg2[%226] : memref<64xi32, #tpu.memory_space<smem>>
      %c0_i32_195 = arith.constant 0 : i32
      %c1_i32_196 = arith.constant 1 : i32
      %c0_i32_197 = arith.constant 0 : i32
      %c0_i32_198 = arith.constant 0 : i32
      %228 = tpu.memref_slice %arg3[%227, %c0_i32_198] : memref<512x128xf32, #tpu.memory_space<any>> -> memref<1x128xf32, #tpu.memory_space<any>>
      %c5_i32_199 = arith.constant 5 : i32
      %c0_i32_200 = arith.constant 0 : i32
      %229 = tpu.memref_slice %arg5[%c0_i32_195, %c1_i32_196, %c5_i32_199, %c0_i32_200] : memref<2x2x8x128xf32, #tpu.memory_space<vmem>> -> memref<1x1x1x128xf32, #tpu.memory_space<vmem>>
      %230 = tpu.memref_squeeze %229 : memref<1x1x1x128xf32, #tpu.memory_space<vmem>> -> memref<1x128xf32, #tpu.memory_space<vmem>>
      %231 = tpu.memref_slice %arg6[%c0_i32_197] : memref<2x!tpu.dma_semaphore, #tpu.memory_space<semaphore_mem>> -> memref<1x!tpu.dma_semaphore, #tpu.memory_space<semaphore_mem>>
      %232 = tpu.memref_squeeze %231 : memref<1x!tpu.dma_semaphore, #tpu.memory_space<semaphore_mem>> -> memref<!tpu.dma_semaphore, #tpu.memory_space<semaphore_mem>>
      tpu.enqueue_dma source(%228 : memref<1x128xf32, #tpu.memory_space<any>>) target(%230 : memref<1x128xf32, #tpu.memory_space<vmem>>) target_semaphore(%232 : memref<!tpu.dma_semaphore, #tpu.memory_space<semaphore_mem>>)
      %c8_i32_201 = arith.constant 8 : i32
      %233 = arith.addi %106, %c8_i32_201 : i32
      %c6_i32_202 = arith.constant 6 : i32
      %234 = arith.addi %233, %c6_i32_202 : i32
      %235 = arith.index_cast %234 : i32 to index
      %236 = memref.load %arg2[%235] : memref<64xi32, #tpu.memory_space<smem>>
      %c0_i32_203 = arith.constant 0 : i32
      %c1_i32_204 = arith.constant 1 : i32
      %c0_i32_205 = arith.constant 0 : i32
      %c0_i32_206 = arith.constant 0 : i32
      %237 = tpu.memref_slice %arg3[%236, %c0_i32_206] : memref<512x128xf32, #tpu.memory_space<any>> -> memref<1x128xf32, #tpu.memory_space<any>>
      %c6_i32_207 = arith.constant 6 : i32
      %c0_i32_208 = arith.constant 0 : i32
      %238 = tpu.memref_slice %arg5[%c0_i32_203, %c1_i32_204, %c6_i32_207, %c0_i32_208] : memref<2x2x8x128xf32, #tpu.memory_space<vmem>> -> memref<1x1x1x128xf32, #tpu.memory_space<vmem>>
      %239 = tpu.memref_squeeze %238 : memref<1x1x1x128xf32, #tpu.memory_space<vmem>> -> memref<1x128xf32, #tpu.memory_space<vmem>>
      %240 = tpu.memref_slice %arg6[%c0_i32_205] : memref<2x!tpu.dma_semaphore, #tpu.memory_space<semaphore_mem>> -> memref<1x!tpu.dma_semaphore, #tpu.memory_space<semaphore_mem>>
      %241 = tpu.memref_squeeze %240 : memref<1x!tpu.dma_semaphore, #tpu.memory_space<semaphore_mem>> -> memref<!tpu.dma_semaphore, #tpu.memory_space<semaphore_mem>>
      tpu.enqueue_dma source(%237 : memref<1x128xf32, #tpu.memory_space<any>>) target(%239 : memref<1x128xf32, #tpu.memory_space<vmem>>) target_semaphore(%241 : memref<!tpu.dma_semaphore, #tpu.memory_space<semaphore_mem>>)
      %c8_i32_209 = arith.constant 8 : i32
      %242 = arith.addi %106, %c8_i32_209 : i32
      %c7_i32_210 = arith.constant 7 : i32
      %243 = arith.addi %242, %c7_i32_210 : i32
      %244 = arith.index_cast %243 : i32 to index
      %245 = memref.load %arg2[%244] : memref<64xi32, #tpu.memory_space<smem>>
      %c0_i32_211 = arith.constant 0 : i32
      %c1_i32_212 = arith.constant 1 : i32
      %c0_i32_213 = arith.constant 0 : i32
      %c0_i32_214 = arith.constant 0 : i32
      %246 = tpu.memref_slice %arg3[%245, %c0_i32_214] : memref<512x128xf32, #tpu.memory_space<any>> -> memref<1x128xf32, #tpu.memory_space<any>>
      %c7_i32_215 = arith.constant 7 : i32
      %c0_i32_216 = arith.constant 0 : i32
      %247 = tpu.memref_slice %arg5[%c0_i32_211, %c1_i32_212, %c7_i32_215, %c0_i32_216] : memref<2x2x8x128xf32, #tpu.memory_space<vmem>> -> memref<1x1x1x128xf32, #tpu.memory_space<vmem>>
      %248 = tpu.memref_squeeze %247 : memref<1x1x1x128xf32, #tpu.memory_space<vmem>> -> memref<1x128xf32, #tpu.memory_space<vmem>>
      %249 = tpu.memref_slice %arg6[%c0_i32_213] : memref<2x!tpu.dma_semaphore, #tpu.memory_space<semaphore_mem>> -> memref<1x!tpu.dma_semaphore, #tpu.memory_space<semaphore_mem>>
      %250 = tpu.memref_squeeze %249 : memref<1x!tpu.dma_semaphore, #tpu.memory_space<semaphore_mem>> -> memref<!tpu.dma_semaphore, #tpu.memory_space<semaphore_mem>>
      tpu.enqueue_dma source(%246 : memref<1x128xf32, #tpu.memory_space<any>>) target(%248 : memref<1x128xf32, #tpu.memory_space<vmem>>) target_semaphore(%250 : memref<!tpu.dma_semaphore, #tpu.memory_space<semaphore_mem>>)
    } else {
    }
    %c1_i32 = arith.constant 1 : i32
    %3 = arith.addi %arg1, %c1_i32 : i32
    %c2_i32 = arith.constant 2 : i32
    %4 = arith.cmpi slt, %3, %c2_i32 : i32
    %5 = arith.extui %4 : i1 to i32
    %c0_i32_1 = arith.constant 0 : i32
    %6 = arith.cmpi ne, %5, %c0_i32_1 : i32
    scf.if %6 {
      %c2_i32_89 = arith.constant 2 : i32
      %105 = arith.muli %arg0, %c2_i32_89 : i32
      %106 = arith.addi %105, %arg1 : i32
      %c1_i32_90 = arith.constant 1 : i32
      %107 = arith.addi %106, %c1_i32_90 : i32
      %c1_i32_91 = arith.constant 1 : i32
      %108 = arith.addi %arg1, %c1_i32_91 : i32
      %c2_i32_92 = arith.constant 2 : i32
      %c0_i32_93 = arith.constant 0 : i32
      %109 = arith.cmpi eq, %c2_i32_92, %c0_i32_93 : i32
      %c1_i32_94 = arith.constant 1 : i32
      %110 = arith.select %109, %c1_i32_94, %c2_i32_92 : i32
      %111 = arith.remsi %108, %110 : i32
      %c0_i32_95 = arith.constant 0 : i32
      %112 = arith.cmpi ne, %111, %c0_i32_95 : i32
      %c0_i32_96 = arith.constant 0 : i32
      %113 = arith.cmpi slt, %111, %c0_i32_96 : i32
      %c0_i32_97 = arith.constant 0 : i32
      %114 = arith.cmpi slt, %110, %c0_i32_97 : i32
      %115 = arith.xori %113, %114 : i1
      %116 = arith.andi %115, %112 : i1
      %117 = arith.addi %111, %110 : i32
      %118 = arith.select %116, %117, %111 : i32
      %c16_i32 = arith.constant 16 : i32
      %119 = arith.muli %107, %c16_i32 : i32
      %c0_i32_98 = arith.constant 0 : i32
      %120 = arith.addi %119, %c0_i32_98 : i32
      %c0_i32_99 = arith.constant 0 : i32
      %121 = arith.addi %120, %c0_i32_99 : i32
      %122 = arith.index_cast %121 : i32 to index
      %123 = memref.load %arg2[%122] : memref<64xi32, #tpu.memory_space<smem>>
      %c0_i32_100 = arith.constant 0 : i32
      %c0_i32_101 = arith.constant 0 : i32
      %124 = tpu.memref_slice %arg3[%123, %c0_i32_101] : memref<512x128xf32, #tpu.memory_space<any>> -> memref<1x128xf32, #tpu.memory_space<any>>
      %c0_i32_102 = arith.constant 0 : i32
      %c0_i32_103 = arith.constant 0 : i32
      %125 = tpu.memref_slice %arg5[%118, %c0_i32_100, %c0_i32_102, %c0_i32_103] : memref<2x2x8x128xf32, #tpu.memory_space<vmem>> -> memref<1x1x1x128xf32, #tpu.memory_space<vmem>>
      %126 = tpu.memref_squeeze %125 : memref<1x1x1x128xf32, #tpu.memory_space<vmem>> -> memref<1x128xf32, #tpu.memory_space<vmem>>
      %127 = tpu.memref_slice %arg6[%118] : memref<2x!tpu.dma_semaphore, #tpu.memory_space<semaphore_mem>> -> memref<1x!tpu.dma_semaphore, #tpu.memory_space<semaphore_mem>>
      %128 = tpu.memref_squeeze %127 : memref<1x!tpu.dma_semaphore, #tpu.memory_space<semaphore_mem>> -> memref<!tpu.dma_semaphore, #tpu.memory_space<semaphore_mem>>
      tpu.enqueue_dma source(%124 : memref<1x128xf32, #tpu.memory_space<any>>) target(%126 : memref<1x128xf32, #tpu.memory_space<vmem>>) target_semaphore(%128 : memref<!tpu.dma_semaphore, #tpu.memory_space<semaphore_mem>>)
      %c0_i32_104 = arith.constant 0 : i32
      %129 = arith.addi %119, %c0_i32_104 : i32
      %c1_i32_105 = arith.constant 1 : i32
      %130 = arith.addi %129, %c1_i32_105 : i32
      %131 = arith.index_cast %130 : i32 to index
      %132 = memref.load %arg2[%131] : memref<64xi32, #tpu.memory_space<smem>>
      %c0_i32_106 = arith.constant 0 : i32
      %c0_i32_107 = arith.constant 0 : i32
      %133 = tpu.memref_slice %arg3[%132, %c0_i32_107] : memref<512x128xf32, #tpu.memory_space<any>> -> memref<1x128xf32, #tpu.memory_space<any>>
      %c1_i32_108 = arith.constant 1 : i32
      %c0_i32_109 = arith.constant 0 : i32
      %134 = tpu.memref_slice %arg5[%118, %c0_i32_106, %c1_i32_108, %c0_i32_109] : memref<2x2x8x128xf32, #tpu.memory_space<vmem>> -> memref<1x1x1x128xf32, #tpu.memory_space<vmem>>
      %135 = tpu.memref_squeeze %134 : memref<1x1x1x128xf32, #tpu.memory_space<vmem>> -> memref<1x128xf32, #tpu.memory_space<vmem>>
      %136 = tpu.memref_slice %arg6[%118] : memref<2x!tpu.dma_semaphore, #tpu.memory_space<semaphore_mem>> -> memref<1x!tpu.dma_semaphore, #tpu.memory_space<semaphore_mem>>
      %137 = tpu.memref_squeeze %136 : memref<1x!tpu.dma_semaphore, #tpu.memory_space<semaphore_mem>> -> memref<!tpu.dma_semaphore, #tpu.memory_space<semaphore_mem>>
      tpu.enqueue_dma source(%133 : memref<1x128xf32, #tpu.memory_space<any>>) target(%135 : memref<1x128xf32, #tpu.memory_space<vmem>>) target_semaphore(%137 : memref<!tpu.dma_semaphore, #tpu.memory_space<semaphore_mem>>)
      %c0_i32_110 = arith.constant 0 : i32
      %138 = arith.addi %119, %c0_i32_110 : i32
      %c2_i32_111 = arith.constant 2 : i32
      %139 = arith.addi %138, %c2_i32_111 : i32
      %140 = arith.index_cast %139 : i32 to index
      %141 = memref.load %arg2[%140] : memref<64xi32, #tpu.memory_space<smem>>
      %c0_i32_112 = arith.constant 0 : i32
      %c0_i32_113 = arith.constant 0 : i32
      %142 = tpu.memref_slice %arg3[%141, %c0_i32_113] : memref<512x128xf32, #tpu.memory_space<any>> -> memref<1x128xf32, #tpu.memory_space<any>>
      %c2_i32_114 = arith.constant 2 : i32
      %c0_i32_115 = arith.constant 0 : i32
      %143 = tpu.memref_slice %arg5[%118, %c0_i32_112, %c2_i32_114, %c0_i32_115] : memref<2x2x8x128xf32, #tpu.memory_space<vmem>> -> memref<1x1x1x128xf32, #tpu.memory_space<vmem>>
      %144 = tpu.memref_squeeze %143 : memref<1x1x1x128xf32, #tpu.memory_space<vmem>> -> memref<1x128xf32, #tpu.memory_space<vmem>>
      %145 = tpu.memref_slice %arg6[%118] : memref<2x!tpu.dma_semaphore, #tpu.memory_space<semaphore_mem>> -> memref<1x!tpu.dma_semaphore, #tpu.memory_space<semaphore_mem>>
      %146 = tpu.memref_squeeze %145 : memref<1x!tpu.dma_semaphore, #tpu.memory_space<semaphore_mem>> -> memref<!tpu.dma_semaphore, #tpu.memory_space<semaphore_mem>>
      tpu.enqueue_dma source(%142 : memref<1x128xf32, #tpu.memory_space<any>>) target(%144 : memref<1x128xf32, #tpu.memory_space<vmem>>) target_semaphore(%146 : memref<!tpu.dma_semaphore, #tpu.memory_space<semaphore_mem>>)
      %c0_i32_116 = arith.constant 0 : i32
      %147 = arith.addi %119, %c0_i32_116 : i32
      %c3_i32_117 = arith.constant 3 : i32
      %148 = arith.addi %147, %c3_i32_117 : i32
      %149 = arith.index_cast %148 : i32 to index
      %150 = memref.load %arg2[%149] : memref<64xi32, #tpu.memory_space<smem>>
      %c0_i32_118 = arith.constant 0 : i32
      %c0_i32_119 = arith.constant 0 : i32
      %151 = tpu.memref_slice %arg3[%150, %c0_i32_119] : memref<512x128xf32, #tpu.memory_space<any>> -> memref<1x128xf32, #tpu.memory_space<any>>
      %c3_i32_120 = arith.constant 3 : i32
      %c0_i32_121 = arith.constant 0 : i32
      %152 = tpu.memref_slice %arg5[%118, %c0_i32_118, %c3_i32_120, %c0_i32_121] : memref<2x2x8x128xf32, #tpu.memory_space<vmem>> -> memref<1x1x1x128xf32, #tpu.memory_space<vmem>>
      %153 = tpu.memref_squeeze %152 : memref<1x1x1x128xf32, #tpu.memory_space<vmem>> -> memref<1x128xf32, #tpu.memory_space<vmem>>
      %154 = tpu.memref_slice %arg6[%118] : memref<2x!tpu.dma_semaphore, #tpu.memory_space<semaphore_mem>> -> memref<1x!tpu.dma_semaphore, #tpu.memory_space<semaphore_mem>>
      %155 = tpu.memref_squeeze %154 : memref<1x!tpu.dma_semaphore, #tpu.memory_space<semaphore_mem>> -> memref<!tpu.dma_semaphore, #tpu.memory_space<semaphore_mem>>
      tpu.enqueue_dma source(%151 : memref<1x128xf32, #tpu.memory_space<any>>) target(%153 : memref<1x128xf32, #tpu.memory_space<vmem>>) target_semaphore(%155 : memref<!tpu.dma_semaphore, #tpu.memory_space<semaphore_mem>>)
      %c0_i32_122 = arith.constant 0 : i32
      %156 = arith.addi %119, %c0_i32_122 : i32
      %c4_i32_123 = arith.constant 4 : i32
      %157 = arith.addi %156, %c4_i32_123 : i32
      %158 = arith.index_cast %157 : i32 to index
      %159 = memref.load %arg2[%158] : memref<64xi32, #tpu.memory_space<smem>>
      %c0_i32_124 = arith.constant 0 : i32
      %c0_i32_125 = arith.constant 0 : i32
      %160 = tpu.memref_slice %arg3[%159, %c0_i32_125] : memref<512x128xf32, #tpu.memory_space<any>> -> memref<1x128xf32, #tpu.memory_space<any>>
      %c4_i32_126 = arith.constant 4 : i32
      %c0_i32_127 = arith.constant 0 : i32
      %161 = tpu.memref_slice %arg5[%118, %c0_i32_124, %c4_i32_126, %c0_i32_127] : memref<2x2x8x128xf32, #tpu.memory_space<vmem>> -> memref<1x1x1x128xf32, #tpu.memory_space<vmem>>
      %162 = tpu.memref_squeeze %161 : memref<1x1x1x128xf32, #tpu.memory_space<vmem>> -> memref<1x128xf32, #tpu.memory_space<vmem>>
      %163 = tpu.memref_slice %arg6[%118] : memref<2x!tpu.dma_semaphore, #tpu.memory_space<semaphore_mem>> -> memref<1x!tpu.dma_semaphore, #tpu.memory_space<semaphore_mem>>
      %164 = tpu.memref_squeeze %163 : memref<1x!tpu.dma_semaphore, #tpu.memory_space<semaphore_mem>> -> memref<!tpu.dma_semaphore, #tpu.memory_space<semaphore_mem>>
      tpu.enqueue_dma source(%160 : memref<1x128xf32, #tpu.memory_space<any>>) target(%162 : memref<1x128xf32, #tpu.memory_space<vmem>>) target_semaphore(%164 : memref<!tpu.dma_semaphore, #tpu.memory_space<semaphore_mem>>)
      %c0_i32_128 = arith.constant 0 : i32
      %165 = arith.addi %119, %c0_i32_128 : i32
      %c5_i32_129 = arith.constant 5 : i32
      %166 = arith.addi %165, %c5_i32_129 : i32
      %167 = arith.index_cast %166 : i32 to index
      %168 = memref.load %arg2[%167] : memref<64xi32, #tpu.memory_space<smem>>
      %c0_i32_130 = arith.constant 0 : i32
      %c0_i32_131 = arith.constant 0 : i32
      %169 = tpu.memref_slice %arg3[%168, %c0_i32_131] : memref<512x128xf32, #tpu.memory_space<any>> -> memref<1x128xf32, #tpu.memory_space<any>>
      %c5_i32_132 = arith.constant 5 : i32
      %c0_i32_133 = arith.constant 0 : i32
      %170 = tpu.memref_slice %arg5[%118, %c0_i32_130, %c5_i32_132, %c0_i32_133] : memref<2x2x8x128xf32, #tpu.memory_space<vmem>> -> memref<1x1x1x128xf32, #tpu.memory_space<vmem>>
      %171 = tpu.memref_squeeze %170 : memref<1x1x1x128xf32, #tpu.memory_space<vmem>> -> memref<1x128xf32, #tpu.memory_space<vmem>>
      %172 = tpu.memref_slice %arg6[%118] : memref<2x!tpu.dma_semaphore, #tpu.memory_space<semaphore_mem>> -> memref<1x!tpu.dma_semaphore, #tpu.memory_space<semaphore_mem>>
      %173 = tpu.memref_squeeze %172 : memref<1x!tpu.dma_semaphore, #tpu.memory_space<semaphore_mem>> -> memref<!tpu.dma_semaphore, #tpu.memory_space<semaphore_mem>>
      tpu.enqueue_dma source(%169 : memref<1x128xf32, #tpu.memory_space<any>>) target(%171 : memref<1x128xf32, #tpu.memory_space<vmem>>) target_semaphore(%173 : memref<!tpu.dma_semaphore, #tpu.memory_space<semaphore_mem>>)
      %c0_i32_134 = arith.constant 0 : i32
      %174 = arith.addi %119, %c0_i32_134 : i32
      %c6_i32_135 = arith.constant 6 : i32
      %175 = arith.addi %174, %c6_i32_135 : i32
      %176 = arith.index_cast %175 : i32 to index
      %177 = memref.load %arg2[%176] : memref<64xi32, #tpu.memory_space<smem>>
      %c0_i32_136 = arith.constant 0 : i32
      %c0_i32_137 = arith.constant 0 : i32
      %178 = tpu.memref_slice %arg3[%177, %c0_i32_137] : memref<512x128xf32, #tpu.memory_space<any>> -> memref<1x128xf32, #tpu.memory_space<any>>
      %c6_i32_138 = arith.constant 6 : i32
      %c0_i32_139 = arith.constant 0 : i32
      %179 = tpu.memref_slice %arg5[%118, %c0_i32_136, %c6_i32_138, %c0_i32_139] : memref<2x2x8x128xf32, #tpu.memory_space<vmem>> -> memref<1x1x1x128xf32, #tpu.memory_space<vmem>>
      %180 = tpu.memref_squeeze %179 : memref<1x1x1x128xf32, #tpu.memory_space<vmem>> -> memref<1x128xf32, #tpu.memory_space<vmem>>
      %181 = tpu.memref_slice %arg6[%118] : memref<2x!tpu.dma_semaphore, #tpu.memory_space<semaphore_mem>> -> memref<1x!tpu.dma_semaphore, #tpu.memory_space<semaphore_mem>>
      %182 = tpu.memref_squeeze %181 : memref<1x!tpu.dma_semaphore, #tpu.memory_space<semaphore_mem>> -> memref<!tpu.dma_semaphore, #tpu.memory_space<semaphore_mem>>
      tpu.enqueue_dma source(%178 : memref<1x128xf32, #tpu.memory_space<any>>) target(%180 : memref<1x128xf32, #tpu.memory_space<vmem>>) target_semaphore(%182 : memref<!tpu.dma_semaphore, #tpu.memory_space<semaphore_mem>>)
      %c0_i32_140 = arith.constant 0 : i32
      %183 = arith.addi %119, %c0_i32_140 : i32
      %c7_i32_141 = arith.constant 7 : i32
      %184 = arith.addi %183, %c7_i32_141 : i32
      %185 = arith.index_cast %184 : i32 to index
      %186 = memref.load %arg2[%185] : memref<64xi32, #tpu.memory_space<smem>>
      %c0_i32_142 = arith.constant 0 : i32
      %c0_i32_143 = arith.constant 0 : i32
      %187 = tpu.memref_slice %arg3[%186, %c0_i32_143] : memref<512x128xf32, #tpu.memory_space<any>> -> memref<1x128xf32, #tpu.memory_space<any>>
      %c7_i32_144 = arith.constant 7 : i32
      %c0_i32_145 = arith.constant 0 : i32
      %188 = tpu.memref_slice %arg5[%118, %c0_i32_142, %c7_i32_144, %c0_i32_145] : memref<2x2x8x128xf32, #tpu.memory_space<vmem>> -> memref<1x1x1x128xf32, #tpu.memory_space<vmem>>
      %189 = tpu.memref_squeeze %188 : memref<1x1x1x128xf32, #tpu.memory_space<vmem>> -> memref<1x128xf32, #tpu.memory_space<vmem>>
      %190 = tpu.memref_slice %arg6[%118] : memref<2x!tpu.dma_semaphore, #tpu.memory_space<semaphore_mem>> -> memref<1x!tpu.dma_semaphore, #tpu.memory_space<semaphore_mem>>
      %191 = tpu.memref_squeeze %190 : memref<1x!tpu.dma_semaphore, #tpu.memory_space<semaphore_mem>> -> memref<!tpu.dma_semaphore, #tpu.memory_space<semaphore_mem>>
      tpu.enqueue_dma source(%187 : memref<1x128xf32, #tpu.memory_space<any>>) target(%189 : memref<1x128xf32, #tpu.memory_space<vmem>>) target_semaphore(%191 : memref<!tpu.dma_semaphore, #tpu.memory_space<semaphore_mem>>)
      %c8_i32 = arith.constant 8 : i32
      %192 = arith.addi %119, %c8_i32 : i32
      %c0_i32_146 = arith.constant 0 : i32
      %193 = arith.addi %192, %c0_i32_146 : i32
      %194 = arith.index_cast %193 : i32 to index
      %195 = memref.load %arg2[%194] : memref<64xi32, #tpu.memory_space<smem>>
      %c1_i32_147 = arith.constant 1 : i32
      %c0_i32_148 = arith.constant 0 : i32
      %196 = tpu.memref_slice %arg3[%195, %c0_i32_148] : memref<512x128xf32, #tpu.memory_space<any>> -> memref<1x128xf32, #tpu.memory_space<any>>
      %c0_i32_149 = arith.constant 0 : i32
      %c0_i32_150 = arith.constant 0 : i32
      %197 = tpu.memref_slice %arg5[%118, %c1_i32_147, %c0_i32_149, %c0_i32_150] : memref<2x2x8x128xf32, #tpu.memory_space<vmem>> -> memref<1x1x1x128xf32, #tpu.memory_space<vmem>>
      %198 = tpu.memref_squeeze %197 : memref<1x1x1x128xf32, #tpu.memory_space<vmem>> -> memref<1x128xf32, #tpu.memory_space<vmem>>
      %199 = tpu.memref_slice %arg6[%118] : memref<2x!tpu.dma_semaphore, #tpu.memory_space<semaphore_mem>> -> memref<1x!tpu.dma_semaphore, #tpu.memory_space<semaphore_mem>>
      %200 = tpu.memref_squeeze %199 : memref<1x!tpu.dma_semaphore, #tpu.memory_space<semaphore_mem>> -> memref<!tpu.dma_semaphore, #tpu.memory_space<semaphore_mem>>
      tpu.enqueue_dma source(%196 : memref<1x128xf32, #tpu.memory_space<any>>) target(%198 : memref<1x128xf32, #tpu.memory_space<vmem>>) target_semaphore(%200 : memref<!tpu.dma_semaphore, #tpu.memory_space<semaphore_mem>>)
      %c8_i32_151 = arith.constant 8 : i32
      %201 = arith.addi %119, %c8_i32_151 : i32
      %c1_i32_152 = arith.constant 1 : i32
      %202 = arith.addi %201, %c1_i32_152 : i32
      %203 = arith.index_cast %202 : i32 to index
      %204 = memref.load %arg2[%203] : memref<64xi32, #tpu.memory_space<smem>>
      %c1_i32_153 = arith.constant 1 : i32
      %c0_i32_154 = arith.constant 0 : i32
      %205 = tpu.memref_slice %arg3[%204, %c0_i32_154] : memref<512x128xf32, #tpu.memory_space<any>> -> memref<1x128xf32, #tpu.memory_space<any>>
      %c1_i32_155 = arith.constant 1 : i32
      %c0_i32_156 = arith.constant 0 : i32
      %206 = tpu.memref_slice %arg5[%118, %c1_i32_153, %c1_i32_155, %c0_i32_156] : memref<2x2x8x128xf32, #tpu.memory_space<vmem>> -> memref<1x1x1x128xf32, #tpu.memory_space<vmem>>
      %207 = tpu.memref_squeeze %206 : memref<1x1x1x128xf32, #tpu.memory_space<vmem>> -> memref<1x128xf32, #tpu.memory_space<vmem>>
      %208 = tpu.memref_slice %arg6[%118] : memref<2x!tpu.dma_semaphore, #tpu.memory_space<semaphore_mem>> -> memref<1x!tpu.dma_semaphore, #tpu.memory_space<semaphore_mem>>
      %209 = tpu.memref_squeeze %208 : memref<1x!tpu.dma_semaphore, #tpu.memory_space<semaphore_mem>> -> memref<!tpu.dma_semaphore, #tpu.memory_space<semaphore_mem>>
      tpu.enqueue_dma source(%205 : memref<1x128xf32, #tpu.memory_space<any>>) target(%207 : memref<1x128xf32, #tpu.memory_space<vmem>>) target_semaphore(%209 : memref<!tpu.dma_semaphore, #tpu.memory_space<semaphore_mem>>)
      %c8_i32_157 = arith.constant 8 : i32
      %210 = arith.addi %119, %c8_i32_157 : i32
      %c2_i32_158 = arith.constant 2 : i32
      %211 = arith.addi %210, %c2_i32_158 : i32
      %212 = arith.index_cast %211 : i32 to index
      %213 = memref.load %arg2[%212] : memref<64xi32, #tpu.memory_space<smem>>
      %c1_i32_159 = arith.constant 1 : i32
      %c0_i32_160 = arith.constant 0 : i32
      %214 = tpu.memref_slice %arg3[%213, %c0_i32_160] : memref<512x128xf32, #tpu.memory_space<any>> -> memref<1x128xf32, #tpu.memory_space<any>>
      %c2_i32_161 = arith.constant 2 : i32
      %c0_i32_162 = arith.constant 0 : i32
      %215 = tpu.memref_slice %arg5[%118, %c1_i32_159, %c2_i32_161, %c0_i32_162] : memref<2x2x8x128xf32, #tpu.memory_space<vmem>> -> memref<1x1x1x128xf32, #tpu.memory_space<vmem>>
      %216 = tpu.memref_squeeze %215 : memref<1x1x1x128xf32, #tpu.memory_space<vmem>> -> memref<1x128xf32, #tpu.memory_space<vmem>>
      %217 = tpu.memref_slice %arg6[%118] : memref<2x!tpu.dma_semaphore, #tpu.memory_space<semaphore_mem>> -> memref<1x!tpu.dma_semaphore, #tpu.memory_space<semaphore_mem>>
      %218 = tpu.memref_squeeze %217 : memref<1x!tpu.dma_semaphore, #tpu.memory_space<semaphore_mem>> -> memref<!tpu.dma_semaphore, #tpu.memory_space<semaphore_mem>>
      tpu.enqueue_dma source(%214 : memref<1x128xf32, #tpu.memory_space<any>>) target(%216 : memref<1x128xf32, #tpu.memory_space<vmem>>) target_semaphore(%218 : memref<!tpu.dma_semaphore, #tpu.memory_space<semaphore_mem>>)
      %c8_i32_163 = arith.constant 8 : i32
      %219 = arith.addi %119, %c8_i32_163 : i32
      %c3_i32_164 = arith.constant 3 : i32
      %220 = arith.addi %219, %c3_i32_164 : i32
      %221 = arith.index_cast %220 : i32 to index
      %222 = memref.load %arg2[%221] : memref<64xi32, #tpu.memory_space<smem>>
      %c1_i32_165 = arith.constant 1 : i32
      %c0_i32_166 = arith.constant 0 : i32
      %223 = tpu.memref_slice %arg3[%222, %c0_i32_166] : memref<512x128xf32, #tpu.memory_space<any>> -> memref<1x128xf32, #tpu.memory_space<any>>
      %c3_i32_167 = arith.constant 3 : i32
      %c0_i32_168 = arith.constant 0 : i32
      %224 = tpu.memref_slice %arg5[%118, %c1_i32_165, %c3_i32_167, %c0_i32_168] : memref<2x2x8x128xf32, #tpu.memory_space<vmem>> -> memref<1x1x1x128xf32, #tpu.memory_space<vmem>>
      %225 = tpu.memref_squeeze %224 : memref<1x1x1x128xf32, #tpu.memory_space<vmem>> -> memref<1x128xf32, #tpu.memory_space<vmem>>
      %226 = tpu.memref_slice %arg6[%118] : memref<2x!tpu.dma_semaphore, #tpu.memory_space<semaphore_mem>> -> memref<1x!tpu.dma_semaphore, #tpu.memory_space<semaphore_mem>>
      %227 = tpu.memref_squeeze %226 : memref<1x!tpu.dma_semaphore, #tpu.memory_space<semaphore_mem>> -> memref<!tpu.dma_semaphore, #tpu.memory_space<semaphore_mem>>
      tpu.enqueue_dma source(%223 : memref<1x128xf32, #tpu.memory_space<any>>) target(%225 : memref<1x128xf32, #tpu.memory_space<vmem>>) target_semaphore(%227 : memref<!tpu.dma_semaphore, #tpu.memory_space<semaphore_mem>>)
      %c8_i32_169 = arith.constant 8 : i32
      %228 = arith.addi %119, %c8_i32_169 : i32
      %c4_i32_170 = arith.constant 4 : i32
      %229 = arith.addi %228, %c4_i32_170 : i32
      %230 = arith.index_cast %229 : i32 to index
      %231 = memref.load %arg2[%230] : memref<64xi32, #tpu.memory_space<smem>>
      %c1_i32_171 = arith.constant 1 : i32
      %c0_i32_172 = arith.constant 0 : i32
      %232 = tpu.memref_slice %arg3[%231, %c0_i32_172] : memref<512x128xf32, #tpu.memory_space<any>> -> memref<1x128xf32, #tpu.memory_space<any>>
      %c4_i32_173 = arith.constant 4 : i32
      %c0_i32_174 = arith.constant 0 : i32
      %233 = tpu.memref_slice %arg5[%118, %c1_i32_171, %c4_i32_173, %c0_i32_174] : memref<2x2x8x128xf32, #tpu.memory_space<vmem>> -> memref<1x1x1x128xf32, #tpu.memory_space<vmem>>
      %234 = tpu.memref_squeeze %233 : memref<1x1x1x128xf32, #tpu.memory_space<vmem>> -> memref<1x128xf32, #tpu.memory_space<vmem>>
      %235 = tpu.memref_slice %arg6[%118] : memref<2x!tpu.dma_semaphore, #tpu.memory_space<semaphore_mem>> -> memref<1x!tpu.dma_semaphore, #tpu.memory_space<semaphore_mem>>
      %236 = tpu.memref_squeeze %235 : memref<1x!tpu.dma_semaphore, #tpu.memory_space<semaphore_mem>> -> memref<!tpu.dma_semaphore, #tpu.memory_space<semaphore_mem>>
      tpu.enqueue_dma source(%232 : memref<1x128xf32, #tpu.memory_space<any>>) target(%234 : memref<1x128xf32, #tpu.memory_space<vmem>>) target_semaphore(%236 : memref<!tpu.dma_semaphore, #tpu.memory_space<semaphore_mem>>)
      %c8_i32_175 = arith.constant 8 : i32
      %237 = arith.addi %119, %c8_i32_175 : i32
      %c5_i32_176 = arith.constant 5 : i32
      %238 = arith.addi %237, %c5_i32_176 : i32
      %239 = arith.index_cast %238 : i32 to index
      %240 = memref.load %arg2[%239] : memref<64xi32, #tpu.memory_space<smem>>
      %c1_i32_177 = arith.constant 1 : i32
      %c0_i32_178 = arith.constant 0 : i32
      %241 = tpu.memref_slice %arg3[%240, %c0_i32_178] : memref<512x128xf32, #tpu.memory_space<any>> -> memref<1x128xf32, #tpu.memory_space<any>>
      %c5_i32_179 = arith.constant 5 : i32
      %c0_i32_180 = arith.constant 0 : i32
      %242 = tpu.memref_slice %arg5[%118, %c1_i32_177, %c5_i32_179, %c0_i32_180] : memref<2x2x8x128xf32, #tpu.memory_space<vmem>> -> memref<1x1x1x128xf32, #tpu.memory_space<vmem>>
      %243 = tpu.memref_squeeze %242 : memref<1x1x1x128xf32, #tpu.memory_space<vmem>> -> memref<1x128xf32, #tpu.memory_space<vmem>>
      %244 = tpu.memref_slice %arg6[%118] : memref<2x!tpu.dma_semaphore, #tpu.memory_space<semaphore_mem>> -> memref<1x!tpu.dma_semaphore, #tpu.memory_space<semaphore_mem>>
      %245 = tpu.memref_squeeze %244 : memref<1x!tpu.dma_semaphore, #tpu.memory_space<semaphore_mem>> -> memref<!tpu.dma_semaphore, #tpu.memory_space<semaphore_mem>>
      tpu.enqueue_dma source(%241 : memref<1x128xf32, #tpu.memory_space<any>>) target(%243 : memref<1x128xf32, #tpu.memory_space<vmem>>) target_semaphore(%245 : memref<!tpu.dma_semaphore, #tpu.memory_space<semaphore_mem>>)
      %c8_i32_181 = arith.constant 8 : i32
      %246 = arith.addi %119, %c8_i32_181 : i32
      %c6_i32_182 = arith.constant 6 : i32
      %247 = arith.addi %246, %c6_i32_182 : i32
      %248 = arith.index_cast %247 : i32 to index
      %249 = memref.load %arg2[%248] : memref<64xi32, #tpu.memory_space<smem>>
      %c1_i32_183 = arith.constant 1 : i32
      %c0_i32_184 = arith.constant 0 : i32
      %250 = tpu.memref_slice %arg3[%249, %c0_i32_184] : memref<512x128xf32, #tpu.memory_space<any>> -> memref<1x128xf32, #tpu.memory_space<any>>
      %c6_i32_185 = arith.constant 6 : i32
      %c0_i32_186 = arith.constant 0 : i32
      %251 = tpu.memref_slice %arg5[%118, %c1_i32_183, %c6_i32_185, %c0_i32_186] : memref<2x2x8x128xf32, #tpu.memory_space<vmem>> -> memref<1x1x1x128xf32, #tpu.memory_space<vmem>>
      %252 = tpu.memref_squeeze %251 : memref<1x1x1x128xf32, #tpu.memory_space<vmem>> -> memref<1x128xf32, #tpu.memory_space<vmem>>
      %253 = tpu.memref_slice %arg6[%118] : memref<2x!tpu.dma_semaphore, #tpu.memory_space<semaphore_mem>> -> memref<1x!tpu.dma_semaphore, #tpu.memory_space<semaphore_mem>>
      %254 = tpu.memref_squeeze %253 : memref<1x!tpu.dma_semaphore, #tpu.memory_space<semaphore_mem>> -> memref<!tpu.dma_semaphore, #tpu.memory_space<semaphore_mem>>
      tpu.enqueue_dma source(%250 : memref<1x128xf32, #tpu.memory_space<any>>) target(%252 : memref<1x128xf32, #tpu.memory_space<vmem>>) target_semaphore(%254 : memref<!tpu.dma_semaphore, #tpu.memory_space<semaphore_mem>>)
      %c8_i32_187 = arith.constant 8 : i32
      %255 = arith.addi %119, %c8_i32_187 : i32
      %c7_i32_188 = arith.constant 7 : i32
      %256 = arith.addi %255, %c7_i32_188 : i32
      %257 = arith.index_cast %256 : i32 to index
      %258 = memref.load %arg2[%257] : memref<64xi32, #tpu.memory_space<smem>>
      %c1_i32_189 = arith.constant 1 : i32
      %c0_i32_190 = arith.constant 0 : i32
      %259 = tpu.memref_slice %arg3[%258, %c0_i32_190] : memref<512x128xf32, #tpu.memory_space<any>> -> memref<1x128xf32, #tpu.memory_space<any>>
      %c7_i32_191 = arith.constant 7 : i32
      %c0_i32_192 = arith.constant 0 : i32
      %260 = tpu.memref_slice %arg5[%118, %c1_i32_189, %c7_i32_191, %c0_i32_192] : memref<2x2x8x128xf32, #tpu.memory_space<vmem>> -> memref<1x1x1x128xf32, #tpu.memory_space<vmem>>
      %261 = tpu.memref_squeeze %260 : memref<1x1x1x128xf32, #tpu.memory_space<vmem>> -> memref<1x128xf32, #tpu.memory_space<vmem>>
      %262 = tpu.memref_slice %arg6[%118] : memref<2x!tpu.dma_semaphore, #tpu.memory_space<semaphore_mem>> -> memref<1x!tpu.dma_semaphore, #tpu.memory_space<semaphore_mem>>
      %263 = tpu.memref_squeeze %262 : memref<1x!tpu.dma_semaphore, #tpu.memory_space<semaphore_mem>> -> memref<!tpu.dma_semaphore, #tpu.memory_space<semaphore_mem>>
      tpu.enqueue_dma source(%259 : memref<1x128xf32, #tpu.memory_space<any>>) target(%261 : memref<1x128xf32, #tpu.memory_space<vmem>>) target_semaphore(%263 : memref<!tpu.dma_semaphore, #tpu.memory_space<semaphore_mem>>)
    } else {
    }
    %c2_i32_2 = arith.constant 2 : i32
    %c0_i32_3 = arith.constant 0 : i32
    %7 = arith.cmpi eq, %c2_i32_2, %c0_i32_3 : i32
    %c1_i32_4 = arith.constant 1 : i32
    %8 = arith.select %7, %c1_i32_4, %c2_i32_2 : i32
    %9 = arith.remsi %arg1, %8 : i32
    %c0_i32_5 = arith.constant 0 : i32
    %10 = arith.cmpi ne, %9, %c0_i32_5 : i32
    %c0_i32_6 = arith.constant 0 : i32
    %11 = arith.cmpi slt, %9, %c0_i32_6 : i32
    %c0_i32_7 = arith.constant 0 : i32
    %12 = arith.cmpi slt, %8, %c0_i32_7 : i32
    %13 = arith.xori %11, %12 : i1
    %14 = arith.andi %13, %10 : i1
    %15 = arith.addi %9, %8 : i32
    %16 = arith.select %14, %15, %9 : i32
    %c0_i32_8 = arith.constant 0 : i32
    %c0_i32_9 = arith.constant 0 : i32
    %c0_i32_10 = arith.constant 0 : i32
    %17 = tpu.memref_slice %arg3[%c0_i32_9, %c0_i32_10] : memref<512x128xf32, #tpu.memory_space<any>> -> memref<1x128xf32, #tpu.memory_space<any>>
    %c0_i32_11 = arith.constant 0 : i32
    %c0_i32_12 = arith.constant 0 : i32
    %18 = tpu.memref_slice %arg5[%16, %c0_i32_8, %c0_i32_11, %c0_i32_12] : memref<2x2x8x128xf32, #tpu.memory_space<vmem>> -> memref<1x1x1x128xf32, #tpu.memory_space<vmem>>
    %19 = tpu.memref_squeeze %18 : memref<1x1x1x128xf32, #tpu.memory_space<vmem>> -> memref<1x128xf32, #tpu.memory_space<vmem>>
    %20 = tpu.memref_slice %arg6[%16] : memref<2x!tpu.dma_semaphore, #tpu.memory_space<semaphore_mem>> -> memref<1x!tpu.dma_semaphore, #tpu.memory_space<semaphore_mem>>
    %21 = tpu.memref_squeeze %20 : memref<1x!tpu.dma_semaphore, #tpu.memory_space<semaphore_mem>> -> memref<!tpu.dma_semaphore, #tpu.memory_space<semaphore_mem>>
    tpu.wait_dma2 semaphore(%21 : memref<!tpu.dma_semaphore, #tpu.memory_space<semaphore_mem>>) src(%17 : memref<1x128xf32, #tpu.memory_space<any>>) dst(%19 : memref<1x128xf32, #tpu.memory_space<vmem>>)
    %c0_i32_13 = arith.constant 0 : i32
    %c0_i32_14 = arith.constant 0 : i32
    %c0_i32_15 = arith.constant 0 : i32
    %22 = tpu.memref_slice %arg3[%c0_i32_14, %c0_i32_15] : memref<512x128xf32, #tpu.memory_space<any>> -> memref<1x128xf32, #tpu.memory_space<any>>
    %c1_i32_16 = arith.constant 1 : i32
    %c0_i32_17 = arith.constant 0 : i32
    %23 = tpu.memref_slice %arg5[%16, %c0_i32_13, %c1_i32_16, %c0_i32_17] : memref<2x2x8x128xf32, #tpu.memory_space<vmem>> -> memref<1x1x1x128xf32, #tpu.memory_space<vmem>>
    %24 = tpu.memref_squeeze %23 : memref<1x1x1x128xf32, #tpu.memory_space<vmem>> -> memref<1x128xf32, #tpu.memory_space<vmem>>
    %25 = tpu.memref_slice %arg6[%16] : memref<2x!tpu.dma_semaphore, #tpu.memory_space<semaphore_mem>> -> memref<1x!tpu.dma_semaphore, #tpu.memory_space<semaphore_mem>>
    %26 = tpu.memref_squeeze %25 : memref<1x!tpu.dma_semaphore, #tpu.memory_space<semaphore_mem>> -> memref<!tpu.dma_semaphore, #tpu.memory_space<semaphore_mem>>
    tpu.wait_dma2 semaphore(%26 : memref<!tpu.dma_semaphore, #tpu.memory_space<semaphore_mem>>) src(%22 : memref<1x128xf32, #tpu.memory_space<any>>) dst(%24 : memref<1x128xf32, #tpu.memory_space<vmem>>)
    %c0_i32_18 = arith.constant 0 : i32
    %c0_i32_19 = arith.constant 0 : i32
    %c0_i32_20 = arith.constant 0 : i32
    %27 = tpu.memref_slice %arg3[%c0_i32_19, %c0_i32_20] : memref<512x128xf32, #tpu.memory_space<any>> -> memref<1x128xf32, #tpu.memory_space<any>>
    %c2_i32_21 = arith.constant 2 : i32
    %c0_i32_22 = arith.constant 0 : i32
    %28 = tpu.memref_slice %arg5[%16, %c0_i32_18, %c2_i32_21, %c0_i32_22] : memref<2x2x8x128xf32, #tpu.memory_space<vmem>> -> memref<1x1x1x128xf32, #tpu.memory_space<vmem>>
    %29 = tpu.memref_squeeze %28 : memref<1x1x1x128xf32, #tpu.memory_space<vmem>> -> memref<1x128xf32, #tpu.memory_space<vmem>>
    %30 = tpu.memref_slice %arg6[%16] : memref<2x!tpu.dma_semaphore, #tpu.memory_space<semaphore_mem>> -> memref<1x!tpu.dma_semaphore, #tpu.memory_space<semaphore_mem>>
    %31 = tpu.memref_squeeze %30 : memref<1x!tpu.dma_semaphore, #tpu.memory_space<semaphore_mem>> -> memref<!tpu.dma_semaphore, #tpu.memory_space<semaphore_mem>>
    tpu.wait_dma2 semaphore(%31 : memref<!tpu.dma_semaphore, #tpu.memory_space<semaphore_mem>>) src(%27 : memref<1x128xf32, #tpu.memory_space<any>>) dst(%29 : memref<1x128xf32, #tpu.memory_space<vmem>>)
    %c0_i32_23 = arith.constant 0 : i32
    %c0_i32_24 = arith.constant 0 : i32
    %c0_i32_25 = arith.constant 0 : i32
    %32 = tpu.memref_slice %arg3[%c0_i32_24, %c0_i32_25] : memref<512x128xf32, #tpu.memory_space<any>> -> memref<1x128xf32, #tpu.memory_space<any>>
    %c3_i32 = arith.constant 3 : i32
    %c0_i32_26 = arith.constant 0 : i32
    %33 = tpu.memref_slice %arg5[%16, %c0_i32_23, %c3_i32, %c0_i32_26] : memref<2x2x8x128xf32, #tpu.memory_space<vmem>> -> memref<1x1x1x128xf32, #tpu.memory_space<vmem>>
    %34 = tpu.memref_squeeze %33 : memref<1x1x1x128xf32, #tpu.memory_space<vmem>> -> memref<1x128xf32, #tpu.memory_space<vmem>>
    %35 = tpu.memref_slice %arg6[%16] : memref<2x!tpu.dma_semaphore, #tpu.memory_space<semaphore_mem>> -> memref<1x!tpu.dma_semaphore, #tpu.memory_space<semaphore_mem>>
    %36 = tpu.memref_squeeze %35 : memref<1x!tpu.dma_semaphore, #tpu.memory_space<semaphore_mem>> -> memref<!tpu.dma_semaphore, #tpu.memory_space<semaphore_mem>>
    tpu.wait_dma2 semaphore(%36 : memref<!tpu.dma_semaphore, #tpu.memory_space<semaphore_mem>>) src(%32 : memref<1x128xf32, #tpu.memory_space<any>>) dst(%34 : memref<1x128xf32, #tpu.memory_space<vmem>>)
    %c0_i32_27 = arith.constant 0 : i32
    %c0_i32_28 = arith.constant 0 : i32
    %c0_i32_29 = arith.constant 0 : i32
    %37 = tpu.memref_slice %arg3[%c0_i32_28, %c0_i32_29] : memref<512x128xf32, #tpu.memory_space<any>> -> memref<1x128xf32, #tpu.memory_space<any>>
    %c4_i32 = arith.constant 4 : i32
    %c0_i32_30 = arith.constant 0 : i32
    %38 = tpu.memref_slice %arg5[%16, %c0_i32_27, %c4_i32, %c0_i32_30] : memref<2x2x8x128xf32, #tpu.memory_space<vmem>> -> memref<1x1x1x128xf32, #tpu.memory_space<vmem>>
    %39 = tpu.memref_squeeze %38 : memref<1x1x1x128xf32, #tpu.memory_space<vmem>> -> memref<1x128xf32, #tpu.memory_space<vmem>>
    %40 = tpu.memref_slice %arg6[%16] : memref<2x!tpu.dma_semaphore, #tpu.memory_space<semaphore_mem>> -> memref<1x!tpu.dma_semaphore, #tpu.memory_space<semaphore_mem>>
    %41 = tpu.memref_squeeze %40 : memref<1x!tpu.dma_semaphore, #tpu.memory_space<semaphore_mem>> -> memref<!tpu.dma_semaphore, #tpu.memory_space<semaphore_mem>>
    tpu.wait_dma2 semaphore(%41 : memref<!tpu.dma_semaphore, #tpu.memory_space<semaphore_mem>>) src(%37 : memref<1x128xf32, #tpu.memory_space<any>>) dst(%39 : memref<1x128xf32, #tpu.memory_space<vmem>>)
    %c0_i32_31 = arith.constant 0 : i32
    %c0_i32_32 = arith.constant 0 : i32
    %c0_i32_33 = arith.constant 0 : i32
    %42 = tpu.memref_slice %arg3[%c0_i32_32, %c0_i32_33] : memref<512x128xf32, #tpu.memory_space<any>> -> memref<1x128xf32, #tpu.memory_space<any>>
    %c5_i32 = arith.constant 5 : i32
    %c0_i32_34 = arith.constant 0 : i32
    %43 = tpu.memref_slice %arg5[%16, %c0_i32_31, %c5_i32, %c0_i32_34] : memref<2x2x8x128xf32, #tpu.memory_space<vmem>> -> memref<1x1x1x128xf32, #tpu.memory_space<vmem>>
    %44 = tpu.memref_squeeze %43 : memref<1x1x1x128xf32, #tpu.memory_space<vmem>> -> memref<1x128xf32, #tpu.memory_space<vmem>>
    %45 = tpu.memref_slice %arg6[%16] : memref<2x!tpu.dma_semaphore, #tpu.memory_space<semaphore_mem>> -> memref<1x!tpu.dma_semaphore, #tpu.memory_space<semaphore_mem>>
    %46 = tpu.memref_squeeze %45 : memref<1x!tpu.dma_semaphore, #tpu.memory_space<semaphore_mem>> -> memref<!tpu.dma_semaphore, #tpu.memory_space<semaphore_mem>>
    tpu.wait_dma2 semaphore(%46 : memref<!tpu.dma_semaphore, #tpu.memory_space<semaphore_mem>>) src(%42 : memref<1x128xf32, #tpu.memory_space<any>>) dst(%44 : memref<1x128xf32, #tpu.memory_space<vmem>>)
    %c0_i32_35 = arith.constant 0 : i32
    %c0_i32_36 = arith.constant 0 : i32
    %c0_i32_37 = arith.constant 0 : i32
    %47 = tpu.memref_slice %arg3[%c0_i32_36, %c0_i32_37] : memref<512x128xf32, #tpu.memory_space<any>> -> memref<1x128xf32, #tpu.memory_space<any>>
    %c6_i32 = arith.constant 6 : i32
    %c0_i32_38 = arith.constant 0 : i32
    %48 = tpu.memref_slice %arg5[%16, %c0_i32_35, %c6_i32, %c0_i32_38] : memref<2x2x8x128xf32, #tpu.memory_space<vmem>> -> memref<1x1x1x128xf32, #tpu.memory_space<vmem>>
    %49 = tpu.memref_squeeze %48 : memref<1x1x1x128xf32, #tpu.memory_space<vmem>> -> memref<1x128xf32, #tpu.memory_space<vmem>>
    %50 = tpu.memref_slice %arg6[%16] : memref<2x!tpu.dma_semaphore, #tpu.memory_space<semaphore_mem>> -> memref<1x!tpu.dma_semaphore, #tpu.memory_space<semaphore_mem>>
    %51 = tpu.memref_squeeze %50 : memref<1x!tpu.dma_semaphore, #tpu.memory_space<semaphore_mem>> -> memref<!tpu.dma_semaphore, #tpu.memory_space<semaphore_mem>>
    tpu.wait_dma2 semaphore(%51 : memref<!tpu.dma_semaphore, #tpu.memory_space<semaphore_mem>>) src(%47 : memref<1x128xf32, #tpu.memory_space<any>>) dst(%49 : memref<1x128xf32, #tpu.memory_space<vmem>>)
    %c0_i32_39 = arith.constant 0 : i32
    %c0_i32_40 = arith.constant 0 : i32
    %c0_i32_41 = arith.constant 0 : i32
    %52 = tpu.memref_slice %arg3[%c0_i32_40, %c0_i32_41] : memref<512x128xf32, #tpu.memory_space<any>> -> memref<1x128xf32, #tpu.memory_space<any>>
    %c7_i32 = arith.constant 7 : i32
    %c0_i32_42 = arith.constant 0 : i32
    %53 = tpu.memref_slice %arg5[%16, %c0_i32_39, %c7_i32, %c0_i32_42] : memref<2x2x8x128xf32, #tpu.memory_space<vmem>> -> memref<1x1x1x128xf32, #tpu.memory_space<vmem>>
    %54 = tpu.memref_squeeze %53 : memref<1x1x1x128xf32, #tpu.memory_space<vmem>> -> memref<1x128xf32, #tpu.memory_space<vmem>>
    %55 = tpu.memref_slice %arg6[%16] : memref<2x!tpu.dma_semaphore, #tpu.memory_space<semaphore_mem>> -> memref<1x!tpu.dma_semaphore, #tpu.memory_space<semaphore_mem>>
    %56 = tpu.memref_squeeze %55 : memref<1x!tpu.dma_semaphore, #tpu.memory_space<semaphore_mem>> -> memref<!tpu.dma_semaphore, #tpu.memory_space<semaphore_mem>>
    tpu.wait_dma2 semaphore(%56 : memref<!tpu.dma_semaphore, #tpu.memory_space<semaphore_mem>>) src(%52 : memref<1x128xf32, #tpu.memory_space<any>>) dst(%54 : memref<1x128xf32, #tpu.memory_space<vmem>>)
    %c1_i32_43 = arith.constant 1 : i32
    %c0_i32_44 = arith.constant 0 : i32
    %c0_i32_45 = arith.constant 0 : i32
    %57 = tpu.memref_slice %arg3[%c0_i32_44, %c0_i32_45] : memref<512x128xf32, #tpu.memory_space<any>> -> memref<1x128xf32, #tpu.memory_space<any>>
    %c0_i32_46 = arith.constant 0 : i32
    %c0_i32_47 = arith.constant 0 : i32
    %58 = tpu.memref_slice %arg5[%16, %c1_i32_43, %c0_i32_46, %c0_i32_47] : memref<2x2x8x128xf32, #tpu.memory_space<vmem>> -> memref<1x1x1x128xf32, #tpu.memory_space<vmem>>
    %59 = tpu.memref_squeeze %58 : memref<1x1x1x128xf32, #tpu.memory_space<vmem>> -> memref<1x128xf32, #tpu.memory_space<vmem>>
    %60 = tpu.memref_slice %arg6[%16] : memref<2x!tpu.dma_semaphore, #tpu.memory_space<semaphore_mem>> -> memref<1x!tpu.dma_semaphore, #tpu.memory_space<semaphore_mem>>
    %61 = tpu.memref_squeeze %60 : memref<1x!tpu.dma_semaphore, #tpu.memory_space<semaphore_mem>> -> memref<!tpu.dma_semaphore, #tpu.memory_space<semaphore_mem>>
    tpu.wait_dma2 semaphore(%61 : memref<!tpu.dma_semaphore, #tpu.memory_space<semaphore_mem>>) src(%57 : memref<1x128xf32, #tpu.memory_space<any>>) dst(%59 : memref<1x128xf32, #tpu.memory_space<vmem>>)
    %c1_i32_48 = arith.constant 1 : i32
    %c0_i32_49 = arith.constant 0 : i32
    %c0_i32_50 = arith.constant 0 : i32
    %62 = tpu.memref_slice %arg3[%c0_i32_49, %c0_i32_50] : memref<512x128xf32, #tpu.memory_space<any>> -> memref<1x128xf32, #tpu.memory_space<any>>
    %c1_i32_51 = arith.constant 1 : i32
    %c0_i32_52 = arith.constant 0 : i32
    %63 = tpu.memref_slice %arg5[%16, %c1_i32_48, %c1_i32_51, %c0_i32_52] : memref<2x2x8x128xf32, #tpu.memory_space<vmem>> -> memref<1x1x1x128xf32, #tpu.memory_space<vmem>>
    %64 = tpu.memref_squeeze %63 : memref<1x1x1x128xf32, #tpu.memory_space<vmem>> -> memref<1x128xf32, #tpu.memory_space<vmem>>
    %65 = tpu.memref_slice %arg6[%16] : memref<2x!tpu.dma_semaphore, #tpu.memory_space<semaphore_mem>> -> memref<1x!tpu.dma_semaphore, #tpu.memory_space<semaphore_mem>>
    %66 = tpu.memref_squeeze %65 : memref<1x!tpu.dma_semaphore, #tpu.memory_space<semaphore_mem>> -> memref<!tpu.dma_semaphore, #tpu.memory_space<semaphore_mem>>
    tpu.wait_dma2 semaphore(%66 : memref<!tpu.dma_semaphore, #tpu.memory_space<semaphore_mem>>) src(%62 : memref<1x128xf32, #tpu.memory_space<any>>) dst(%64 : memref<1x128xf32, #tpu.memory_space<vmem>>)
    %c1_i32_53 = arith.constant 1 : i32
    %c0_i32_54 = arith.constant 0 : i32
    %c0_i32_55 = arith.constant 0 : i32
    %67 = tpu.memref_slice %arg3[%c0_i32_54, %c0_i32_55] : memref<512x128xf32, #tpu.memory_space<any>> -> memref<1x128xf32, #tpu.memory_space<any>>
    %c2_i32_56 = arith.constant 2 : i32
    %c0_i32_57 = arith.constant 0 : i32
    %68 = tpu.memref_slice %arg5[%16, %c1_i32_53, %c2_i32_56, %c0_i32_57] : memref<2x2x8x128xf32, #tpu.memory_space<vmem>> -> memref<1x1x1x128xf32, #tpu.memory_space<vmem>>
    %69 = tpu.memref_squeeze %68 : memref<1x1x1x128xf32, #tpu.memory_space<vmem>> -> memref<1x128xf32, #tpu.memory_space<vmem>>
    %70 = tpu.memref_slice %arg6[%16] : memref<2x!tpu.dma_semaphore, #tpu.memory_space<semaphore_mem>> -> memref<1x!tpu.dma_semaphore, #tpu.memory_space<semaphore_mem>>
    %71 = tpu.memref_squeeze %70 : memref<1x!tpu.dma_semaphore, #tpu.memory_space<semaphore_mem>> -> memref<!tpu.dma_semaphore, #tpu.memory_space<semaphore_mem>>
    tpu.wait_dma2 semaphore(%71 : memref<!tpu.dma_semaphore, #tpu.memory_space<semaphore_mem>>) src(%67 : memref<1x128xf32, #tpu.memory_space<any>>) dst(%69 : memref<1x128xf32, #tpu.memory_space<vmem>>)
    %c1_i32_58 = arith.constant 1 : i32
    %c0_i32_59 = arith.constant 0 : i32
    %c0_i32_60 = arith.constant 0 : i32
    %72 = tpu.memref_slice %arg3[%c0_i32_59, %c0_i32_60] : memref<512x128xf32, #tpu.memory_space<any>> -> memref<1x128xf32, #tpu.memory_space<any>>
    %c3_i32_61 = arith.constant 3 : i32
    %c0_i32_62 = arith.constant 0 : i32
    %73 = tpu.memref_slice %arg5[%16, %c1_i32_58, %c3_i32_61, %c0_i32_62] : memref<2x2x8x128xf32, #tpu.memory_space<vmem>> -> memref<1x1x1x128xf32, #tpu.memory_space<vmem>>
    %74 = tpu.memref_squeeze %73 : memref<1x1x1x128xf32, #tpu.memory_space<vmem>> -> memref<1x128xf32, #tpu.memory_space<vmem>>
    %75 = tpu.memref_slice %arg6[%16] : memref<2x!tpu.dma_semaphore, #tpu.memory_space<semaphore_mem>> -> memref<1x!tpu.dma_semaphore, #tpu.memory_space<semaphore_mem>>
    %76 = tpu.memref_squeeze %75 : memref<1x!tpu.dma_semaphore, #tpu.memory_space<semaphore_mem>> -> memref<!tpu.dma_semaphore, #tpu.memory_space<semaphore_mem>>
    tpu.wait_dma2 semaphore(%76 : memref<!tpu.dma_semaphore, #tpu.memory_space<semaphore_mem>>) src(%72 : memref<1x128xf32, #tpu.memory_space<any>>) dst(%74 : memref<1x128xf32, #tpu.memory_space<vmem>>)
    %c1_i32_63 = arith.constant 1 : i32
    %c0_i32_64 = arith.constant 0 : i32
    %c0_i32_65 = arith.constant 0 : i32
    %77 = tpu.memref_slice %arg3[%c0_i32_64, %c0_i32_65] : memref<512x128xf32, #tpu.memory_space<any>> -> memref<1x128xf32, #tpu.memory_space<any>>
    %c4_i32_66 = arith.constant 4 : i32
    %c0_i32_67 = arith.constant 0 : i32
    %78 = tpu.memref_slice %arg5[%16, %c1_i32_63, %c4_i32_66, %c0_i32_67] : memref<2x2x8x128xf32, #tpu.memory_space<vmem>> -> memref<1x1x1x128xf32, #tpu.memory_space<vmem>>
    %79 = tpu.memref_squeeze %78 : memref<1x1x1x128xf32, #tpu.memory_space<vmem>> -> memref<1x128xf32, #tpu.memory_space<vmem>>
    %80 = tpu.memref_slice %arg6[%16] : memref<2x!tpu.dma_semaphore, #tpu.memory_space<semaphore_mem>> -> memref<1x!tpu.dma_semaphore, #tpu.memory_space<semaphore_mem>>
    %81 = tpu.memref_squeeze %80 : memref<1x!tpu.dma_semaphore, #tpu.memory_space<semaphore_mem>> -> memref<!tpu.dma_semaphore, #tpu.memory_space<semaphore_mem>>
    tpu.wait_dma2 semaphore(%81 : memref<!tpu.dma_semaphore, #tpu.memory_space<semaphore_mem>>) src(%77 : memref<1x128xf32, #tpu.memory_space<any>>) dst(%79 : memref<1x128xf32, #tpu.memory_space<vmem>>)
    %c1_i32_68 = arith.constant 1 : i32
    %c0_i32_69 = arith.constant 0 : i32
    %c0_i32_70 = arith.constant 0 : i32
    %82 = tpu.memref_slice %arg3[%c0_i32_69, %c0_i32_70] : memref<512x128xf32, #tpu.memory_space<any>> -> memref<1x128xf32, #tpu.memory_space<any>>
    %c5_i32_71 = arith.constant 5 : i32
    %c0_i32_72 = arith.constant 0 : i32
    %83 = tpu.memref_slice %arg5[%16, %c1_i32_68, %c5_i32_71, %c0_i32_72] : memref<2x2x8x128xf32, #tpu.memory_space<vmem>> -> memref<1x1x1x128xf32, #tpu.memory_space<vmem>>
    %84 = tpu.memref_squeeze %83 : memref<1x1x1x128xf32, #tpu.memory_space<vmem>> -> memref<1x128xf32, #tpu.memory_space<vmem>>
    %85 = tpu.memref_slice %arg6[%16] : memref<2x!tpu.dma_semaphore, #tpu.memory_space<semaphore_mem>> -> memref<1x!tpu.dma_semaphore, #tpu.memory_space<semaphore_mem>>
    %86 = tpu.memref_squeeze %85 : memref<1x!tpu.dma_semaphore, #tpu.memory_space<semaphore_mem>> -> memref<!tpu.dma_semaphore, #tpu.memory_space<semaphore_mem>>
    tpu.wait_dma2 semaphore(%86 : memref<!tpu.dma_semaphore, #tpu.memory_space<semaphore_mem>>) src(%82 : memref<1x128xf32, #tpu.memory_space<any>>) dst(%84 : memref<1x128xf32, #tpu.memory_space<vmem>>)
    %c1_i32_73 = arith.constant 1 : i32
    %c0_i32_74 = arith.constant 0 : i32
    %c0_i32_75 = arith.constant 0 : i32
    %87 = tpu.memref_slice %arg3[%c0_i32_74, %c0_i32_75] : memref<512x128xf32, #tpu.memory_space<any>> -> memref<1x128xf32, #tpu.memory_space<any>>
    %c6_i32_76 = arith.constant 6 : i32
    %c0_i32_77 = arith.constant 0 : i32
    %88 = tpu.memref_slice %arg5[%16, %c1_i32_73, %c6_i32_76, %c0_i32_77] : memref<2x2x8x128xf32, #tpu.memory_space<vmem>> -> memref<1x1x1x128xf32, #tpu.memory_space<vmem>>
    %89 = tpu.memref_squeeze %88 : memref<1x1x1x128xf32, #tpu.memory_space<vmem>> -> memref<1x128xf32, #tpu.memory_space<vmem>>
    %90 = tpu.memref_slice %arg6[%16] : memref<2x!tpu.dma_semaphore, #tpu.memory_space<semaphore_mem>> -> memref<1x!tpu.dma_semaphore, #tpu.memory_space<semaphore_mem>>
    %91 = tpu.memref_squeeze %90 : memref<1x!tpu.dma_semaphore, #tpu.memory_space<semaphore_mem>> -> memref<!tpu.dma_semaphore, #tpu.memory_space<semaphore_mem>>
    tpu.wait_dma2 semaphore(%91 : memref<!tpu.dma_semaphore, #tpu.memory_space<semaphore_mem>>) src(%87 : memref<1x128xf32, #tpu.memory_space<any>>) dst(%89 : memref<1x128xf32, #tpu.memory_space<vmem>>)
    %c1_i32_78 = arith.constant 1 : i32
    %c0_i32_79 = arith.constant 0 : i32
    %c0_i32_80 = arith.constant 0 : i32
    %92 = tpu.memref_slice %arg3[%c0_i32_79, %c0_i32_80] : memref<512x128xf32, #tpu.memory_space<any>> -> memref<1x128xf32, #tpu.memory_space<any>>
    %c7_i32_81 = arith.constant 7 : i32
    %c0_i32_82 = arith.constant 0 : i32
    %93 = tpu.memref_slice %arg5[%16, %c1_i32_78, %c7_i32_81, %c0_i32_82] : memref<2x2x8x128xf32, #tpu.memory_space<vmem>> -> memref<1x1x1x128xf32, #tpu.memory_space<vmem>>
    %94 = tpu.memref_squeeze %93 : memref<1x1x1x128xf32, #tpu.memory_space<vmem>> -> memref<1x128xf32, #tpu.memory_space<vmem>>
    %95 = tpu.memref_slice %arg6[%16] : memref<2x!tpu.dma_semaphore, #tpu.memory_space<semaphore_mem>> -> memref<1x!tpu.dma_semaphore, #tpu.memory_space<semaphore_mem>>
    %96 = tpu.memref_squeeze %95 : memref<1x!tpu.dma_semaphore, #tpu.memory_space<semaphore_mem>> -> memref<!tpu.dma_semaphore, #tpu.memory_space<semaphore_mem>>
    tpu.wait_dma2 semaphore(%96 : memref<!tpu.dma_semaphore, #tpu.memory_space<semaphore_mem>>) src(%92 : memref<1x128xf32, #tpu.memory_space<any>>) dst(%94 : memref<1x128xf32, #tpu.memory_space<vmem>>)
    %97 = arith.index_cast %16 : i32 to index
    %c0 = arith.constant 0 : index
    %c0_83 = arith.constant 0 : index
    %c0_84 = arith.constant 0 : index
    %98 = vector.load %arg5[%97, %c0, %c0_83, %c0_84] : memref<2x2x8x128xf32, #tpu.memory_space<vmem>>, vector<1x2x8x128xf32>
    %99 = vector.shape_cast %98 : vector<1x2x8x128xf32> to vector<2x8x128xf32>
    %cst = arith.constant dense<0.000000e+00> : vector<2x128xf32>
    %100 = vector.multi_reduction <add>, %99, %cst [1] : vector<2x8x128xf32> to vector<2x128xf32>
    %cst_85 = arith.constant 1.250000e-01 : f32
    %101 = vector.broadcast %cst_85 : f32 to vector<2x128xf32>
    %102 = arith.mulf %100, %101 : vector<2x128xf32>
    %103 = vector.shape_cast %102 : vector<2x128xf32> to vector<1x2x128xf32>
    %c0_86 = arith.constant 0 : index
    %c0_87 = arith.constant 0 : index
    %c0_88 = arith.constant 0 : index
    %104 = vector.load %arg4[%c0_86, %c0_87, %c0_88] : memref<1x2x128xf32, #tpu.memory_space<vmem>>, vector<1x2x128xf32>
    tpu.vector_store %arg4[%c0_86, %c0_87, %c0_88], %103 {strides = array<i32>} : memref<1x2x128xf32, #tpu.memory_space<vmem>>, vector<1x2x128xf32>,
    return
  }
  func.func @transform_1(%arg0: i32, %arg1: i32, %arg2: memref<64xi32, #tpu.memory_space<smem>>) -> (i32, i32, i32) {
    %c2_i32 = arith.constant 2 : i32
    %0 = arith.muli %arg0, %c2_i32 : i32
    %1 = arith.addi %0, %arg1 : i32
    %c0_i32 = arith.constant 0 : i32
    %c0_i32_0 = arith.constant 0 : i32
    %c0_i32_1 = arith.constant 0 : i32
    return %1, %c0_i32, %c0_i32_0 : i32, i32, i32
  }
}

</mosaic_0001>

<llo_original>
// kernel: tpu_custom_call.1
$region0: #{tpu_custom_call.1}
  #allocation0 [shape = 'u32[]', space=smem, size = 0x4, offset = 0x4, fixed_abs, tag = 'smem constant byte address 0x4 - core index']
  #allocation1 [shape = 'u32[144,128]{1,0:T(1,128)}', space=vmem, size = 0x12000, scoped, tag = 'internal scratch']
  #allocation2 [shape = 'f32[2,2,8,128]{3,2,1,0:T(8,128)}', space=vmem, size = 0x4000, scoped, tag = 'scratch operand']
  #allocation3 [shape = 's32[2]{0}', space=sflag, size = 0x8, scoped, tag = 'scratch operand']
  #allocation4 [shape = 's32[1]{0}', space=sflag, size = 0x4, scoped, tag = 'scoped memory for tpu_custom_call.1']
  #allocation5 [shape = 'u8[512]{0}', space=smem, size = 0x200, scoped, tag = 'prefetched SMEM operand 0']
  #allocation8 [shape = 's32[]', space=sflag, size = 0x4, offset = 0, fixed_abs, tag = 'sflag constant byte address 0x0 - dummy sync flag']
  #allocation9 [shape = 's32[]', space=sflag, size = 0x4, offset = 0, fixed_abs, tag = 'sflag constant byte address 0x0 - dummy sync flag']
  #allocation10 [shape = 'u32[]', space=smem, size = 0x4, offset = 0x44, fixed_abs, tag = 'smem constant byte address 0x44 - assertion arg 0']
  #allocation11 [shape = 'u32[]', space=smem, size = 0x4, offset = 0x48, fixed_abs, tag = 'smem constant byte address 0x48 - assertion arg 1']
  #allocation12 [shape = 's32[]', space=sflag, size = 0x4, offset = 0, fixed_abs, tag = 'sflag constant byte address 0x0 - dummy sync flag']
  #allocation13 [shape = 's32[]', space=sflag, size = 0x4, offset = 0, fixed_abs, tag = 'sflag constant byte address 0x0 - dummy sync flag']
  #allocation14 [shape = 's32[]', space=sflag, size = 0x4, offset = 0, fixed_abs, tag = 'sflag constant byte address 0x0 - dummy sync flag']
  #allocation15 [shape = 's32[]', space=sflag, size = 0x4, offset = 0, fixed_abs, tag = 'sflag constant byte address 0x0 - dummy sync flag']
  #allocation16 [shape = 's32[]', space=sflag, size = 0x4, offset = 0, fixed_abs, tag = 'sflag constant byte address 0x0 - dummy sync flag']
  #allocation17 [shape = 's32[]', space=sflag, size = 0x4, offset = 0, fixed_abs, tag = 'sflag constant byte address 0x0 - dummy sync flag']
  #allocation18 [shape = 's32[]', space=sflag, size = 0x4, offset = 0, fixed_abs, tag = 'sflag constant byte address 0x0 - dummy sync flag']
  #allocation19 [shape = 's32[]', space=sflag, size = 0x4, offset = 0, fixed_abs, tag = 'sflag constant byte address 0x0 - dummy sync flag']
  #allocation20 [shape = 's32[]', space=sflag, size = 0x4, offset = 0, fixed_abs, tag = 'sflag constant byte address 0x0 - dummy sync flag']
  #allocation21 [shape = 's32[]', space=sflag, size = 0x4, offset = 0, fixed_abs, tag = 'sflag constant byte address 0x0 - dummy sync flag']
  #allocation22 [shape = 's32[]', space=sflag, size = 0x4, offset = 0, fixed_abs, tag = 'sflag constant byte address 0x0 - dummy sync flag']
  #allocation23 [shape = 's32[]', space=sflag, size = 0x4, offset = 0, fixed_abs, tag = 'sflag constant byte address 0x0 - dummy sync flag']
  #allocation24 [shape = 's32[]', space=sflag, size = 0x4, offset = 0, fixed_abs, tag = 'sflag constant byte address 0x0 - dummy sync flag']
  #allocation25 [shape = 's32[]', space=sflag, size = 0x4, offset = 0, fixed_abs, tag = 'sflag constant byte address 0x0 - dummy sync flag']
  #allocation26 [shape = 's32[]', space=sflag, size = 0x4, offset = 0, fixed_abs, tag = 'sflag constant byte address 0x0 - dummy sync flag']
  #allocation27 [shape = 's32[]', space=sflag, size = 0x4, offset = 0, fixed_abs, tag = 'sflag constant byte address 0x0 - dummy sync flag']
  #allocation28 [shape = 's32[]', space=sflag, size = 0x4, offset = 0, fixed_abs, tag = 'sflag constant byte address 0x0 - dummy sync flag']
  #allocation29 [shape = 's32[]', space=sflag, size = 0x4, offset = 0, fixed_abs, tag = 'sflag constant byte address 0x0 - dummy sync flag']
  #allocation30 [shape = 's32[]', space=sflag, size = 0x4, offset = 0, fixed_abs, tag = 'sflag constant byte address 0x0 - dummy sync flag']
  #allocation31 [shape = 's32[]', space=sflag, size = 0x4, offset = 0, fixed_abs, tag = 'sflag constant byte address 0x0 - dummy sync flag']
  #allocation32 [shape = 's32[]', space=sflag, size = 0x4, offset = 0, fixed_abs, tag = 'sflag constant byte address 0x0 - dummy sync flag']
  #allocation33 [shape = 's32[]', space=sflag, size = 0x4, offset = 0, fixed_abs, tag = 'sflag constant byte address 0x0 - dummy sync flag']
  #allocation34 [shape = 's32[]', space=sflag, size = 0x4, offset = 0, fixed_abs, tag = 'sflag constant byte address 0x0 - dummy sync flag']
  #allocation35 [shape = 's32[]', space=sflag, size = 0x4, offset = 0, fixed_abs, tag = 'sflag constant byte address 0x0 - dummy sync flag']
  #allocation36 [shape = 's32[]', space=sflag, size = 0x4, offset = 0, fixed_abs, tag = 'sflag constant byte address 0x0 - dummy sync flag']
  #allocation37 [shape = 's32[]', space=sflag, size = 0x4, offset = 0, fixed_abs, tag = 'sflag constant byte address 0x0 - dummy sync flag']
  #allocation38 [shape = 's32[]', space=sflag, size = 0x4, offset = 0, fixed_abs, tag = 'sflag constant byte address 0x0 - dummy sync flag']
  #allocation39 [shape = 's32[]', space=sflag, size = 0x4, offset = 0, fixed_abs, tag = 'sflag constant byte address 0x0 - dummy sync flag']
  #allocation40 [shape = 's32[]', space=sflag, size = 0x4, offset = 0, fixed_abs, tag = 'sflag constant byte address 0x0 - dummy sync flag']
  #allocation41 [shape = 's32[]', space=sflag, size = 0x4, offset = 0, fixed_abs, tag = 'sflag constant byte address 0x0 - dummy sync flag']
  #allocation42 [shape = 's32[]', space=sflag, size = 0x4, offset = 0, fixed_abs, tag = 'sflag constant byte address 0x0 - dummy sync flag']
  #allocation43 [shape = 's32[]', space=sflag, size = 0x4, offset = 0, fixed_abs, tag = 'sflag constant byte address 0x0 - dummy sync flag']
  #allocation44 [shape = 's32[]', space=sflag, size = 0x4, offset = 0, fixed_abs, tag = 'sflag constant byte address 0x0 - dummy sync flag']
  #allocation45 [shape = 's32[]', space=sflag, size = 0x4, offset = 0, fixed_abs, tag = 'sflag constant byte address 0x0 - dummy sync flag']
  #allocation46 [shape = 's32[]', space=sflag, size = 0x4, offset = 0, fixed_abs, tag = 'sflag constant byte address 0x0 - dummy sync flag']
  #allocation47 [shape = 's32[]', space=sflag, size = 0x4, offset = 0, fixed_abs, tag = 'sflag constant byte address 0x0 - dummy sync flag']
  #allocation48 [shape = 's32[]', space=sflag, size = 0x4, offset = 0, fixed_abs, tag = 'sflag constant byte address 0x0 - dummy sync flag']
  #allocation49 [shape = 's32[]', space=sflag, size = 0x4, offset = 0, fixed_abs, tag = 'sflag constant byte address 0x0 - dummy sync flag']
  #allocation50 [shape = 's32[]', space=sflag, size = 0x4, offset = 0, fixed_abs, tag = 'sflag constant byte address 0x0 - dummy sync flag']
  #allocation51 [shape = 's32[]', space=sflag, size = 0x4, offset = 0, fixed_abs, tag = 'sflag constant byte address 0x0 - dummy sync flag']
  #allocation52 [shape = 's32[]', space=sflag, size = 0x4, offset = 0, fixed_abs, tag = 'sflag constant byte address 0x0 - dummy sync flag']
  #allocation53 [shape = 's32[]', space=sflag, size = 0x4, offset = 0, fixed_abs, tag = 'sflag constant byte address 0x0 - dummy sync flag']
  #allocation54 [shape = 's32[]', space=sflag, size = 0x4, offset = 0, fixed_abs, tag = 'sflag constant byte address 0x0 - dummy sync flag']
  #allocation55 [shape = 's32[]', space=sflag, size = 0x4, offset = 0, fixed_abs, tag = 'sflag constant byte address 0x0 - dummy sync flag']
  #allocation56 [shape = 's32[]', space=sflag, size = 0x4, offset = 0, fixed_abs, tag = 'sflag constant byte address 0x0 - dummy sync flag']
  #allocation57 [shape = 's32[]', space=sflag, size = 0x4, offset = 0, fixed_abs, tag = 'sflag constant byte address 0x0 - dummy sync flag']
  #allocation58 [shape = 's32[]', space=sflag, size = 0x4, offset = 0, fixed_abs, tag = 'sflag constant byte address 0x0 - dummy sync flag']
  #allocation59 [shape = 's32[]', space=sflag, size = 0x4, offset = 0, fixed_abs, tag = 'sflag constant byte address 0x0 - dummy sync flag']
  #allocation60 [shape = 's32[]', space=sflag, size = 0x4, offset = 0, fixed_abs, tag = 'sflag constant byte address 0x0 - dummy sync flag']
  #allocation61 [shape = 's32[]', space=sflag, size = 0x4, offset = 0, fixed_abs, tag = 'sflag constant byte address 0x0 - dummy sync flag']
  #allocation62 [shape = 's32[]', space=sflag, size = 0x4, offset = 0, fixed_abs, tag = 'sflag constant byte address 0x0 - dummy sync flag']
  #allocation63 [shape = 's32[]', space=sflag, size = 0x4, offset = 0, fixed_abs, tag = 'sflag constant byte address 0x0 - dummy sync flag']
  #allocation64 [shape = 's32[]', space=sflag, size = 0x4, offset = 0, fixed_abs, tag = 'sflag constant byte address 0x0 - dummy sync flag']
  #allocation65 [shape = 's32[]', space=sflag, size = 0x4, offset = 0, fixed_abs, tag = 'sflag constant byte address 0x0 - dummy sync flag']
  #allocation66 [shape = 's32[]', space=sflag, size = 0x4, offset = 0, fixed_abs, tag = 'sflag constant byte address 0x0 - dummy sync flag']
  #allocation67 [shape = 's32[]', space=sflag, size = 0x4, offset = 0, fixed_abs, tag = 'sflag constant byte address 0x0 - dummy sync flag']
  #allocation68 [shape = 's32[]', space=sflag, size = 0x4, offset = 0, fixed_abs, tag = 'sflag constant byte address 0x0 - dummy sync flag']
  #allocation69 [shape = 's32[]', space=sflag, size = 0x4, offset = 0, fixed_abs, tag = 'sflag constant byte address 0x0 - dummy sync flag']
  #allocation70 [shape = 's32[]', space=sflag, size = 0x4, offset = 0, fixed_abs, tag = 'sflag constant byte address 0x0 - dummy sync flag']
  #allocation71 [shape = 's32[]', space=sflag, size = 0x4, offset = 0, fixed_abs, tag = 'sflag constant byte address 0x0 - dummy sync flag']
  #allocation72 [shape = 's32[]', space=sflag, size = 0x4, offset = 0, fixed_abs, tag = 'sflag constant byte address 0x0 - dummy sync flag']
  #allocation73 [shape = 's32[]', space=sflag, size = 0x4, offset = 0, fixed_abs, tag = 'sflag constant byte address 0x0 - dummy sync flag']
  %s0 = inlined_call_operand.hbm [shape: s32[64], index: 0, kind: input, shape index: {}]
  %s1 = inlined_call_operand.hbm [shape: f32[512,128], index: 1, kind: input, shape index: {}]
  %s2 = inlined_call_operand.hbm [shape: f32[4,2,128], index: 2, kind: output, shape index: {}]
  %s3 = sld [smem:[#allocation0]]
  $region161: #{tpu_custom_call.1} parent=0
    _
  %s5 = ssub.s32 1, %s3
  %s6 = scalar_select 0, %s5, %s3
  %8 = dma.hbm_to_smem %s0, 16, [#allocation5], [#allocation4]
  %9 = dma.done [#allocation4], 16
  %10 = sfence
  $region1: #{tpu_custom_call.1} parent=0
    #allocation6 [shape = 'u8[2048]{0}', space=vmem, size = 0x800, scoped, tag = 'output window, operand 0']
    #allocation7 [shape = 's32[2]{0}', space=sflag, size = 0x8, scoped, tag = 'scoped memory for tpu_custom_call.1']
    %11 = vsyncpa [#allocation7], 0
    %s12 = scalar_lea.sflag [#allocation7], 1
    %13 = vsyncpa %s12, 0
    loop: start=0, step=1, limit=5
    $region2: #{tpu_custom_call.1} parent=1 // loop_pre_header
      _
    $region3: #{tpu_custom_call.1} parent=1 // loop_header
      %s15 = sphi 0, %s19
      %p16 = scmp.ge.s32.totalorder %s15, 5
      %s21 = sphi 0, %s31
      %s22 = sphi 0, %s27
      %s23 = sphi 0, %s21
      %s24 = sphi 0, %s22
      %s38 = sphi 0, %s40
      %s41 = sphi 0, %s38
      %s51 = sphi 0, %s41
    $region4: #{tpu_custom_call.1} parent=1 // loop_header_branch
      %18 = sbr.rel (%p16) target = $region8
    $region5: #{tpu_custom_call.1} parent=1 // loop_body
      %s20 = ssub.s32 %s15, 1
      %s25 = sadd.s32 1, %s22
      %p26 = scmp.ge.s32.totalorder %s25, 2
      %s27 = scalar_select %p26, 0, %s25
      %s28 = sadd.s32 1, %s21
      %s29 = scalar_select %p26, %s28, %s21
      %p30 = scmp.ge.s32.totalorder %s29, 2
      %s31 = scalar_select %p30, 0, %s29
      %s32 = smul.u32 %s21, 2
      %s33 = sadd.s32 %s32, %s22
      %s34 = smul.u32 %s31, 2
      %s35 = sadd.s32 %s34, %s27
      %s36 = ssub.s32 %s33, %s35
      %p37 = scmp.eq.s32.totalorder %s36, 0
      %s39 = sadd.s32 %s38, 1
      %s40 = scalar_select %p37, %s38, %s39
      %p42 = pneg %p37
      %p43 = scmp.eq.s32.totalorder %s15, 3
      %p44 = por %p42, %p43
      %p45 = scmp.ne.s32.totalorder %s38, %s41
      %p46 = scmp.eq.s32.totalorder %s15, 0
      %p47 = por %p45, %p46
      %p48 = scmp.ne.s32.totalorder %s38, %s41
      %p49 = scmp.eq.s32.totalorder %s20, 3
      %p50 = por %p48, %p49
      %p52 = scmp.ne.s32.totalorder %s41, %s51
      %p53 = scmp.eq.s32.totalorder %s20, 0
      %p54 = por %p52, %p53
      %p55 = scmp.lt.s32.totalorder %s15, 4
      // Predicated region
      $region9: #{tpu_custom_call.1} parent=5 // pred_check
        %p56 = pneg %p55
      $region10: #{tpu_custom_call.1} parent=5 // pred_check_branch
        %58 = sbr.rel (%p56) target = $region12
      $region11: #{tpu_custom_call.1} parent=5 // pred_region
        %p59 = pneg %p47
        %p60 = pneg %p44
        %s61 = sand.u32 %s38, 1
        %s62 = scalar_lea.sflag [#allocation7], %s61
        %s63 = sand.u32 %s38, 1
        %s64 = smul.addr %s63, 2
        %s65 = scalar_lea.vmem [#allocation6], %s64
        %s66 = smul.u32 %s21, 2
        %s67 = sadd.s32 %s66, %s22
        %p68 = scmp.eq.s32.totalorder %s22, 0
        // Predicated region
        $region13: #{tpu_custom_call.1} parent=11 // pred_check
          %p69 = pneg %p68
        $region14: #{tpu_custom_call.1} parent=11 // pred_check_branch
          %71 = sbr.rel (%p69) target = $region16
        $region15: #{tpu_custom_call.1} parent=11 // pred_region
          %s72 = smul.u32 %s21, 32
          %s73 = sld [smem:[#allocation5 + %s72]]
          %s74 = smul.addr %s73, 16
          %s75 = scalar_lea.hbm %s1, %s74
          // Predicated region
          $region17: #{tpu_custom_call.1} parent=15 // pred_check
            _
          $region18: #{tpu_custom_call.1} parent=15 // pred_check_branch
            %77 = sbr.rel target = $region20
          $region19: #{tpu_custom_call.1} parent=15 // pred_region
            %78 = sst [smem:[#allocation10]] [#allocation9]
            %79 = sst [smem:[#allocation11]] [#allocation8]
          $region20: #{tpu_custom_call.1} parent=15 // pred_fallthru
            _
          %81 = shalt.err (0)
          %s83 = sshll.u32 [#allocation2], 4
          %s84 = int_to_ptr.vmem [resolvable:$true] %s83
          %86 = dma.hbm_to_vmem [thread:$0]  %s75, 16, %s84, [#allocation3]
          %s87 = sadd.s32 %s72, 1
          %s88 = sld [smem:[#allocation5 + %s87]]
          %s89 = smul.addr %s88, 16
          %s90 = scalar_lea.hbm %s1, %s89
          %s91 = scalar_lea.vmem [#allocation2], 1
          // Predicated region
          $region21: #{tpu_custom_call.1} parent=15 // pred_check
            _
          $region22: #{tpu_custom_call.1} parent=15 // pred_check_branch
            %93 = sbr.rel target = $region24
          $region23: #{tpu_custom_call.1} parent=15 // pred_region
            %94 = sst [smem:[#allocation10]] [#allocation13]
            %95 = sst [smem:[#allocation11]] [#allocation12]
          $region24: #{tpu_custom_call.1} parent=15 // pred_fallthru
            _
          %97 = shalt.err (0)
          %s99 = sshll.u32 %s91, 4
          %s100 = int_to_ptr.vmem [resolvable:$true] %s99
          %102 = dma.hbm_to_vmem [thread:$0]  %s90, 16, %s100, [#allocation3]
          %s103 = sadd.s32 %s72, 2
          %s104 = sld [smem:[#allocation5 + %s103]]
          %s105 = smul.addr %s104, 16
          %s106 = scalar_lea.hbm %s1, %s105
          %s107 = scalar_lea.vmem [#allocation2], 2
          // Predicated region
          $region25: #{tpu_custom_call.1} parent=15 // pred_check
            _
          $region26: #{tpu_custom_call.1} parent=15 // pred_check_branch
            %109 = sbr.rel target = $region28
          $region27: #{tpu_custom_call.1} parent=15 // pred_region
            %110 = sst [smem:[#allocation10]] [#allocation15]
            %111 = sst [smem:[#allocation11]] [#allocation14]
          $region28: #{tpu_custom_call.1} parent=15 // pred_fallthru
            _
          %113 = shalt.err (0)
          %s115 = sshll.u32 %s107, 4
          %s116 = int_to_ptr.vmem [resolvable:$true] %s115
          %118 = dma.hbm_to_vmem [thread:$0]  %s106, 16, %s116, [#allocation3]
          %s119 = sadd.s32 %s72, 3
          %s120 = sld [smem:[#allocation5 + %s119]]
          %s121 = smul.addr %s120, 16
          %s122 = scalar_lea.hbm %s1, %s121
          %s123 = scalar_lea.vmem [#allocation2], 3
          // Predicated region
          $region29: #{tpu_custom_call.1} parent=15 // pred_check
            _
          $region30: #{tpu_custom_call.1} parent=15 // pred_check_branch
            %125 = sbr.rel target = $region32
          $region31: #{tpu_custom_call.1} parent=15 // pred_region
            %126 = sst [smem:[#allocation10]] [#allocation17]
            %127 = sst [smem:[#allocation11]] [#allocation16]
          $region32: #{tpu_custom_call.1} parent=15 // pred_fallthru
            _
          %129 = shalt.err (0)
          %s131 = sshll.u32 %s123, 4
          %s132 = int_to_ptr.vmem [resolvable:$true] %s131
          %134 = dma.hbm_to_vmem [thread:$0]  %s122, 16, %s132, [#allocation3]
          %s135 = sadd.s32 %s72, 4
          %s136 = sld [smem:[#allocation5 + %s135]]
          %s137 = smul.addr %s136, 16
          %s138 = scalar_lea.hbm %s1, %s137
          %s139 = scalar_lea.vmem [#allocation2], 4
          // Predicated region
          $region33: #{tpu_custom_call.1} parent=15 // pred_check
            _
          $region34: #{tpu_custom_call.1} parent=15 // pred_check_branch
            %141 = sbr.rel target = $region36
          $region35: #{tpu_custom_call.1} parent=15 // pred_region
            %142 = sst [smem:[#allocation10]] [#allocation19]
            %143 = sst [smem:[#allocation11]] [#allocation18]
          $region36: #{tpu_custom_call.1} parent=15 // pred_fallthru
            _
          %145 = shalt.err (0)
          %s147 = sshll.u32 %s139, 4
          %s148 = int_to_ptr.vmem [resolvable:$true] %s147
          %150 = dma.hbm_to_vmem [thread:$0]  %s138, 16, %s148, [#allocation3]
          %s151 = sadd.s32 %s72, 5
          %s152 = sld [smem:[#allocation5 + %s151]]
          %s153 = smul.addr %s152, 16
          %s154 = scalar_lea.hbm %s1, %s153
          %s155 = scalar_lea.vmem [#allocation2], 5
          // Predicated region
          $region37: #{tpu_custom_call.1} parent=15 // pred_check
            _
          $region38: #{tpu_custom_call.1} parent=15 // pred_check_branch
            %157 = sbr.rel target = $region40
          $region39: #{tpu_custom_call.1} parent=15 // pred_region
            %158 = sst [smem:[#allocation10]] [#allocation21]
            %159 = sst [smem:[#allocation11]] [#allocation20]
          $region40: #{tpu_custom_call.1} parent=15 // pred_fallthru
            _
          %161 = shalt.err (0)
          %s163 = sshll.u32 %s155, 4
          %s164 = int_to_ptr.vmem [resolvable:$true] %s163
          %166 = dma.hbm_to_vmem [thread:$0]  %s154, 16, %s164, [#allocation3]
          %s167 = sadd.s32 %s72, 6
          %s168 = sld [smem:[#allocation5 + %s167]]
          %s169 = smul.addr %s168, 16
          %s170 = scalar_lea.hbm %s1, %s169
          %s171 = scalar_lea.vmem [#allocation2], 6
          // Predicated region
          $region41: #{tpu_custom_call.1} parent=15 // pred_check
            _
          $region42: #{tpu_custom_call.1} parent=15 // pred_check_branch
            %173 = sbr.rel target = $region44
          $region43: #{tpu_custom_call.1} parent=15 // pred_region
            %174 = sst [smem:[#allocation10]] [#allocation23]
            %175 = sst [smem:[#allocation11]] [#allocation22]
          $region44: #{tpu_custom_call.1} parent=15 // pred_fallthru
            _
          %177 = shalt.err (0)
          %s179 = sshll.u32 %s171, 4
          %s180 = int_to_ptr.vmem [resolvable:$true] %s179
          %182 = dma.hbm_to_vmem [thread:$0]  %s170, 16, %s180, [#allocation3]
          %s183 = sadd.s32 %s72, 7
          %s184 = sld [smem:[#allocation5 + %s183]]
          %s185 = smul.addr %s184, 16
          %s186 = scalar_lea.hbm %s1, %s185
          %s187 = scalar_lea.vmem [#allocation2], 7
          // Predicated region
          $region45: #{tpu_custom_call.1} parent=15 // pred_check
            _
          $region46: #{tpu_custom_call.1} parent=15 // pred_check_branch
            %189 = sbr.rel target = $region48
          $region47: #{tpu_custom_call.1} parent=15 // pred_region
            %190 = sst [smem:[#allocation10]] [#allocation25]
            %191 = sst [smem:[#allocation11]] [#allocation24]
          $region48: #{tpu_custom_call.1} parent=15 // pred_fallthru
            _
          %193 = shalt.err (0)
          %s195 = sshll.u32 %s187, 4
          %s196 = int_to_ptr.vmem [resolvable:$true] %s195
          %198 = dma.hbm_to_vmem [thread:$0]  %s186, 16, %s196, [#allocation3]
          %s199 = sadd.s32 %s72, 8
          %s200 = sld [smem:[#allocation5 + %s199]]
          %s201 = smul.addr %s200, 16
          %s202 = scalar_lea.hbm %s1, %s201
          %s203 = scalar_lea.vmem [#allocation2], 8
          // Predicated region
          $region49: #{tpu_custom_call.1} parent=15 // pred_check
            _
          $region50: #{tpu_custom_call.1} parent=15 // pred_check_branch
            %205 = sbr.rel target = $region52
          $region51: #{tpu_custom_call.1} parent=15 // pred_region
            %206 = sst [smem:[#allocation10]] [#allocation27]
            %207 = sst [smem:[#allocation11]] [#allocation26]
          $region52: #{tpu_custom_call.1} parent=15 // pred_fallthru
            _
          %209 = shalt.err (0)
          %s211 = sshll.u32 %s203, 4
          %s212 = int_to_ptr.vmem [resolvable:$true] %s211
          %214 = dma.hbm_to_vmem [thread:$0]  %s202, 16, %s212, [#allocation3]
          %s215 = sadd.s32 %s72, 9
          %s216 = sld [smem:[#allocation5 + %s215]]
          %s217 = smul.addr %s216, 16
          %s218 = scalar_lea.hbm %s1, %s217
          %s219 = scalar_lea.vmem [#allocation2], 9
          // Predicated region
          $region53: #{tpu_custom_call.1} parent=15 // pred_check
            _
          $region54: #{tpu_custom_call.1} parent=15 // pred_check_branch
            %221 = sbr.rel target = $region56
          $region55: #{tpu_custom_call.1} parent=15 // pred_region
            %222 = sst [smem:[#allocation10]] [#allocation29]
            %223 = sst [smem:[#allocation11]] [#allocation28]
          $region56: #{tpu_custom_call.1} parent=15 // pred_fallthru
            _
          %225 = shalt.err (0)
          %s227 = sshll.u32 %s219, 4
          %s228 = int_to_ptr.vmem [resolvable:$true] %s227
          %230 = dma.hbm_to_vmem [thread:$0]  %s218, 16, %s228, [#allocation3]
          %s231 = sadd.s32 %s72, 10
          %s232 = sld [smem:[#allocation5 + %s231]]
          %s233 = smul.addr %s232, 16
          %s234 = scalar_lea.hbm %s1, %s233
          %s235 = scalar_lea.vmem [#allocation2], 10
          // Predicated region
          $region57: #{tpu_custom_call.1} parent=15 // pred_check
            _
          $region58: #{tpu_custom_call.1} parent=15 // pred_check_branch
            %237 = sbr.rel target = $region60
          $region59: #{tpu_custom_call.1} parent=15 // pred_region
            %238 = sst [smem:[#allocation10]] [#allocation31]
            %239 = sst [smem:[#allocation11]] [#allocation30]
          $region60: #{tpu_custom_call.1} parent=15 // pred_fallthru
            _
          %241 = shalt.err (0)
          %s243 = sshll.u32 %s235, 4
          %s244 = int_to_ptr.vmem [resolvable:$true] %s243
          %246 = dma.hbm_to_vmem [thread:$0]  %s234, 16, %s244, [#allocation3]
          %s247 = sadd.s32 %s72, 11
          %s248 = sld [smem:[#allocation5 + %s247]]
          %s249 = smul.addr %s248, 16
          %s250 = scalar_lea.hbm %s1, %s249
          %s251 = scalar_lea.vmem [#allocation2], 11
          // Predicated region
          $region61: #{tpu_custom_call.1} parent=15 // pred_check
            _
          $region62: #{tpu_custom_call.1} parent=15 // pred_check_branch
            %253 = sbr.rel target = $region64
          $region63: #{tpu_custom_call.1} parent=15 // pred_region
            %254 = sst [smem:[#allocation10]] [#allocation33]
            %255 = sst [smem:[#allocation11]] [#allocation32]
          $region64: #{tpu_custom_call.1} parent=15 // pred_fallthru
            _
          %257 = shalt.err (0)
          %s259 = sshll.u32 %s251, 4
          %s260 = int_to_ptr.vmem [resolvable:$true] %s259
          %262 = dma.hbm_to_vmem [thread:$0]  %s250, 16, %s260, [#allocation3]
          %s263 = sadd.s32 %s72, 12
          %s264 = sld [smem:[#allocation5 + %s263]]
          %s265 = smul.addr %s264, 16
          %s266 = scalar_lea.hbm %s1, %s265
          %s267 = scalar_lea.vmem [#allocation2], 12
          // Predicated region
          $region65: #{tpu_custom_call.1} parent=15 // pred_check
            _
          $region66: #{tpu_custom_call.1} parent=15 // pred_check_branch
            %269 = sbr.rel target = $region68
          $region67: #{tpu_custom_call.1} parent=15 // pred_region
            %270 = sst [smem:[#allocation10]] [#allocation35]
            %271 = sst [smem:[#allocation11]] [#allocation34]
          $region68: #{tpu_custom_call.1} parent=15 // pred_fallthru
            _
          %273 = shalt.err (0)
          %s275 = sshll.u32 %s267, 4
          %s276 = int_to_ptr.vmem [resolvable:$true] %s275
          %278 = dma.hbm_to_vmem [thread:$0]  %s266, 16, %s276, [#allocation3]
          %s279 = sadd.s32 %s72, 13
          %s280 = sld [smem:[#allocation5 + %s279]]
          %s281 = smul.addr %s280, 16
          %s282 = scalar_lea.hbm %s1, %s281
          %s283 = scalar_lea.vmem [#allocation2], 13
          // Predicated region
          $region69: #{tpu_custom_call.1} parent=15 // pred_check
            _
          $region70: #{tpu_custom_call.1} parent=15 // pred_check_branch
            %285 = sbr.rel target = $region72
          $region71: #{tpu_custom_call.1} parent=15 // pred_region
            %286 = sst [smem:[#allocation10]] [#allocation37]
            %287 = sst [smem:[#allocation11]] [#allocation36]
          $region72: #{tpu_custom_call.1} parent=15 // pred_fallthru
            _
          %289 = shalt.err (0)
          %s291 = sshll.u32 %s283, 4
          %s292 = int_to_ptr.vmem [resolvable:$true] %s291
          %294 = dma.hbm_to_vmem [thread:$0]  %s282, 16, %s292, [#allocation3]
          %s295 = sadd.s32 %s72, 14
          %s296 = sld [smem:[#allocation5 + %s295]]
          %s297 = smul.addr %s296, 16
          %s298 = scalar_lea.hbm %s1, %s297
          %s299 = scalar_lea.vmem [#allocation2], 14
          // Predicated region
          $region73: #{tpu_custom_call.1} parent=15 // pred_check
            _
          $region74: #{tpu_custom_call.1} parent=15 // pred_check_branch
            %301 = sbr.rel target = $region76
          $region75: #{tpu_custom_call.1} parent=15 // pred_region
            %302 = sst [smem:[#allocation10]] [#allocation39]
            %303 = sst [smem:[#allocation11]] [#allocation38]
          $region76: #{tpu_custom_call.1} parent=15 // pred_fallthru
            _
          %305 = shalt.err (0)
          %s307 = sshll.u32 %s299, 4
          %s308 = int_to_ptr.vmem [resolvable:$true] %s307
          %310 = dma.hbm_to_vmem [thread:$0]  %s298, 16, %s308, [#allocation3]
          %s311 = sadd.s32 %s72, 15
          %s312 = sld [smem:[#allocation5 + %s311]]
          %s313 = smul.addr %s312, 16
          %s314 = scalar_lea.hbm %s1, %s313
          %s315 = scalar_lea.vmem [#allocation2], 15
          // Predicated region
          $region77: #{tpu_custom_call.1} parent=15 // pred_check
            _
          $region78: #{tpu_custom_call.1} parent=15 // pred_check_branch
            %317 = sbr.rel target = $region80
          $region79: #{tpu_custom_call.1} parent=15 // pred_region
            %318 = sst [smem:[#allocation10]] [#allocation41]
            %319 = sst [smem:[#allocation11]] [#allocation40]
          $region80: #{tpu_custom_call.1} parent=15 // pred_fallthru
            _
          %321 = shalt.err (0)
          %s323 = sshll.u32 %s315, 4
          %s324 = int_to_ptr.vmem [resolvable:$true] %s323
          %326 = dma.hbm_to_vmem [thread:$0]  %s314, 16, %s324, [#allocation3]
        $region16: #{tpu_custom_call.1} parent=11 // pred_fallthru
          _
        %s327 = sadd.s32 %s22, 1
        %p328 = scmp.lt.s32.totalorder %s327, 2
        // Predicated region
        $region81: #{tpu_custom_call.1} parent=11 // pred_check
          %p329 = pneg %p328
        $region82: #{tpu_custom_call.1} parent=11 // pred_check_branch
          %331 = sbr.rel (%p329) target = $region84
        $region83: #{tpu_custom_call.1} parent=11 // pred_region
          %s332 = smul.u32 %s21, 2
          %s333 = sadd.s32 %s332, %s22
          %s334 = sadd.s32 %s333, 1
          %p335 = scmp.lt.s32.totalorder %s327, 0
          %s336 = ssub.s32 0, %s327
          %s337 = scalar_select %p335, %s336, %s327
          %s338 = sand.u32 %s337, 1
          %s339 = ssub.s32 0, %s338
          %s340 = scalar_select %p335, %s339, %s338
          %p341 = scmp.ne.s32.totalorder %s340, 0
          %p342 = scmp.lt.s32.totalorder %s340, 0
          %p343 = pnand %p342, %p341
          %p344 = pneg %p343
          %s345 = sadd.s32 %s340, 2
          %s346 = scalar_select %p344, %s345, %s340
          %s347 = smul.u32 %s334, 16
          %s348 = sld [smem:[#allocation5 + %s347]]
          %s349 = smul.addr %s348, 16
          %s350 = scalar_lea.hbm %s1, %s349
          %s351 = smul.u32 %s346, 16
          %s352 = scalar_lea.vmem [#allocation2], %s351
          %s353 = scalar_lea.sflag [#allocation3], %s346
          // Predicated region
          $region85: #{tpu_custom_call.1} parent=83 // pred_check
            _
          $region86: #{tpu_custom_call.1} parent=83 // pred_check_branch
            %355 = sbr.rel target = $region88
          $region87: #{tpu_custom_call.1} parent=83 // pred_region
            %356 = sst [smem:[#allocation10]] [#allocation43]
            %357 = sst [smem:[#allocation11]] [#allocation42]
          $region88: #{tpu_custom_call.1} parent=83 // pred_fallthru
            _
          %359 = shalt.err (0)
          %s361 = sshll.u32 %s352, 4
          %s362 = int_to_ptr.vmem [resolvable:$true] %s361
          %364 = dma.hbm_to_vmem [thread:$0]  %s350, 16, %s362, %s353
          %s365 = sadd.s32 %s347, 1
          %s366 = sld [smem:[#allocation5 + %s365]]
          %s367 = smul.addr %s366, 16
          %s368 = scalar_lea.hbm %s1, %s367
          %s369 = sadd.s32 1, %s351
          %s370 = scalar_lea.vmem [#allocation2], %s369
          // Predicated region
          $region89: #{tpu_custom_call.1} parent=83 // pred_check
            _
          $region90: #{tpu_custom_call.1} parent=83 // pred_check_branch
            %372 = sbr.rel target = $region92
          $region91: #{tpu_custom_call.1} parent=83 // pred_region
            %373 = sst [smem:[#allocation10]] [#allocation45]
            %374 = sst [smem:[#allocation11]] [#allocation44]
          $region92: #{tpu_custom_call.1} parent=83 // pred_fallthru
            _
          %376 = shalt.err (0)
          %s378 = sshll.u32 %s370, 4
          %s379 = int_to_ptr.vmem [resolvable:$true] %s378
          %381 = dma.hbm_to_vmem [thread:$0]  %s368, 16, %s379, %s353
          %s382 = sadd.s32 %s347, 2
          %s383 = sld [smem:[#allocation5 + %s382]]
          %s384 = smul.addr %s383, 16
          %s385 = scalar_lea.hbm %s1, %s384
          %s386 = sadd.s32 2, %s351
          %s387 = scalar_lea.vmem [#allocation2], %s386
          // Predicated region
          $region93: #{tpu_custom_call.1} parent=83 // pred_check
            _
          $region94: #{tpu_custom_call.1} parent=83 // pred_check_branch
            %389 = sbr.rel target = $region96
          $region95: #{tpu_custom_call.1} parent=83 // pred_region
            %390 = sst [smem:[#allocation10]] [#allocation47]
            %391 = sst [smem:[#allocation11]] [#allocation46]
          $region96: #{tpu_custom_call.1} parent=83 // pred_fallthru
            _
          %393 = shalt.err (0)
          %s395 = sshll.u32 %s387, 4
          %s396 = int_to_ptr.vmem [resolvable:$true] %s395
          %398 = dma.hbm_to_vmem [thread:$0]  %s385, 16, %s396, %s353
          %s399 = sadd.s32 %s347, 3
          %s400 = sld [smem:[#allocation5 + %s399]]
          %s401 = smul.addr %s400, 16
          %s402 = scalar_lea.hbm %s1, %s401
          %s403 = sadd.s32 3, %s351
          %s404 = scalar_lea.vmem [#allocation2], %s403
          // Predicated region
          $region97: #{tpu_custom_call.1} parent=83 // pred_check
            _
          $region98: #{tpu_custom_call.1} parent=83 // pred_check_branch
            %406 = sbr.rel target = $region100
          $region99: #{tpu_custom_call.1} parent=83 // pred_region
            %407 = sst [smem:[#allocation10]] [#allocation49]
            %408 = sst [smem:[#allocation11]] [#allocation48]
          $region100: #{tpu_custom_call.1} parent=83 // pred_fallthru
            _
          %410 = shalt.err (0)
          %s412 = sshll.u32 %s404, 4
          %s413 = int_to_ptr.vmem [resolvable:$true] %s412
          %415 = dma.hbm_to_vmem [thread:$0]  %s402, 16, %s413, %s353
          %s416 = sadd.s32 %s347, 4
          %s417 = sld [smem:[#allocation5 + %s416]]
          %s418 = smul.addr %s417, 16
          %s419 = scalar_lea.hbm %s1, %s418
          %s420 = sadd.s32 4, %s351
          %s421 = scalar_lea.vmem [#allocation2], %s420
          // Predicated region
          $region101: #{tpu_custom_call.1} parent=83 // pred_check
            _
          $region102: #{tpu_custom_call.1} parent=83 // pred_check_branch
            %423 = sbr.rel target = $region104
          $region103: #{tpu_custom_call.1} parent=83 // pred_region
            %424 = sst [smem:[#allocation10]] [#allocation51]
            %425 = sst [smem:[#allocation11]] [#allocation50]
          $region104: #{tpu_custom_call.1} parent=83 // pred_fallthru
            _
          %427 = shalt.err (0)
          %s429 = sshll.u32 %s421, 4
          %s430 = int_to_ptr.vmem [resolvable:$true] %s429
          %432 = dma.hbm_to_vmem [thread:$0]  %s419, 16, %s430, %s353
          %s433 = sadd.s32 %s347, 5
          %s434 = sld [smem:[#allocation5 + %s433]]
          %s435 = smul.addr %s434, 16
          %s436 = scalar_lea.hbm %s1, %s435
          %s437 = sadd.s32 5, %s351
          %s438 = scalar_lea.vmem [#allocation2], %s437
          // Predicated region
          $region105: #{tpu_custom_call.1} parent=83 // pred_check
            _
          $region106: #{tpu_custom_call.1} parent=83 // pred_check_branch
            %440 = sbr.rel target = $region108
          $region107: #{tpu_custom_call.1} parent=83 // pred_region
            %441 = sst [smem:[#allocation10]] [#allocation53]
            %442 = sst [smem:[#allocation11]] [#allocation52]
          $region108: #{tpu_custom_call.1} parent=83 // pred_fallthru
            _
          %444 = shalt.err (0)
          %s446 = sshll.u32 %s438, 4
          %s447 = int_to_ptr.vmem [resolvable:$true] %s446
          %449 = dma.hbm_to_vmem [thread:$0]  %s436, 16, %s447, %s353
          %s450 = sadd.s32 %s347, 6
          %s451 = sld [smem:[#allocation5 + %s450]]
          %s452 = smul.addr %s451, 16
          %s453 = scalar_lea.hbm %s1, %s452
          %s454 = sadd.s32 6, %s351
          %s455 = scalar_lea.vmem [#allocation2], %s454
          // Predicated region
          $region109: #{tpu_custom_call.1} parent=83 // pred_check
            _
          $region110: #{tpu_custom_call.1} parent=83 // pred_check_branch
            %457 = sbr.rel target = $region112
          $region111: #{tpu_custom_call.1} parent=83 // pred_region
            %458 = sst [smem:[#allocation10]] [#allocation55]
            %459 = sst [smem:[#allocation11]] [#allocation54]
          $region112: #{tpu_custom_call.1} parent=83 // pred_fallthru
            _
          %461 = shalt.err (0)
          %s463 = sshll.u32 %s455, 4
          %s464 = int_to_ptr.vmem [resolvable:$true] %s463
          %466 = dma.hbm_to_vmem [thread:$0]  %s453, 16, %s464, %s353
          %s467 = sadd.s32 %s347, 7
          %s468 = sld [smem:[#allocation5 + %s467]]
          %s469 = smul.addr %s468, 16
          %s470 = scalar_lea.hbm %s1, %s469
          %s471 = sadd.s32 7, %s351
          %s472 = scalar_lea.vmem [#allocation2], %s471
          // Predicated region
          $region113: #{tpu_custom_call.1} parent=83 // pred_check
            _
          $region114: #{tpu_custom_call.1} parent=83 // pred_check_branch
            %474 = sbr.rel target = $region116
          $region115: #{tpu_custom_call.1} parent=83 // pred_region
            %475 = sst [smem:[#allocation10]] [#allocation57]
            %476 = sst [smem:[#allocation11]] [#allocation56]
          $region116: #{tpu_custom_call.1} parent=83 // pred_fallthru
            _
          %478 = shalt.err (0)
          %s480 = sshll.u32 %s472, 4
          %s481 = int_to_ptr.vmem [resolvable:$true] %s480
          %483 = dma.hbm_to_vmem [thread:$0]  %s470, 16, %s481, %s353
          %s484 = sadd.s32 %s347, 8
          %s485 = sld [smem:[#allocation5 + %s484]]
          %s486 = smul.addr %s485, 16
          %s487 = scalar_lea.hbm %s1, %s486
          %s488 = sadd.s32 8, %s351
          %s489 = scalar_lea.vmem [#allocation2], %s488
          // Predicated region
          $region117: #{tpu_custom_call.1} parent=83 // pred_check
            _
          $region118: #{tpu_custom_call.1} parent=83 // pred_check_branch
            %491 = sbr.rel target = $region120
          $region119: #{tpu_custom_call.1} parent=83 // pred_region
            %492 = sst [smem:[#allocation10]] [#allocation59]
            %493 = sst [smem:[#allocation11]] [#allocation58]
          $region120: #{tpu_custom_call.1} parent=83 // pred_fallthru
            _
          %495 = shalt.err (0)
          %s497 = sshll.u32 %s489, 4
          %s498 = int_to_ptr.vmem [resolvable:$true] %s497
          %500 = dma.hbm_to_vmem [thread:$0]  %s487, 16, %s498, %s353
          %s501 = sadd.s32 %s347, 9
          %s502 = sld [smem:[#allocation5 + %s501]]
          %s503 = smul.addr %s502, 16
          %s504 = scalar_lea.hbm %s1, %s503
          %s505 = sadd.s32 9, %s351
          %s506 = scalar_lea.vmem [#allocation2], %s505
          // Predicated region
          $region121: #{tpu_custom_call.1} parent=83 // pred_check
            _
          $region122: #{tpu_custom_call.1} parent=83 // pred_check_branch
            %508 = sbr.rel target = $region124
          $region123: #{tpu_custom_call.1} parent=83 // pred_region
            %509 = sst [smem:[#allocation10]] [#allocation61]
            %510 = sst [smem:[#allocation11]] [#allocation60]
          $region124: #{tpu_custom_call.1} parent=83 // pred_fallthru
            _
          %512 = shalt.err (0)
          %s514 = sshll.u32 %s506, 4
          %s515 = int_to_ptr.vmem [resolvable:$true] %s514
          %517 = dma.hbm_to_vmem [thread:$0]  %s504, 16, %s515, %s353
          %s518 = sadd.s32 %s347, 10
          %s519 = sld [smem:[#allocation5 + %s518]]
          %s520 = smul.addr %s519, 16
          %s521 = scalar_lea.hbm %s1, %s520
          %s522 = sadd.s32 10, %s351
          %s523 = scalar_lea.vmem [#allocation2], %s522
          // Predicated region
          $region125: #{tpu_custom_call.1} parent=83 // pred_check
            _
          $region126: #{tpu_custom_call.1} parent=83 // pred_check_branch
            %525 = sbr.rel target = $region128
          $region127: #{tpu_custom_call.1} parent=83 // pred_region
            %526 = sst [smem:[#allocation10]] [#allocation63]
            %527 = sst [smem:[#allocation11]] [#allocation62]
          $region128: #{tpu_custom_call.1} parent=83 // pred_fallthru
            _
          %529 = shalt.err (0)
          %s531 = sshll.u32 %s523, 4
          %s532 = int_to_ptr.vmem [resolvable:$true] %s531
          %534 = dma.hbm_to_vmem [thread:$0]  %s521, 16, %s532, %s353
          %s535 = sadd.s32 %s347, 11
          %s536 = sld [smem:[#allocation5 + %s535]]
          %s537 = smul.addr %s536, 16
          %s538 = scalar_lea.hbm %s1, %s537
          %s539 = sadd.s32 11, %s351
          %s540 = scalar_lea.vmem [#allocation2], %s539
          // Predicated region
          $region129: #{tpu_custom_call.1} parent=83 // pred_check
            _
          $region130: #{tpu_custom_call.1} parent=83 // pred_check_branch
            %542 = sbr.rel target = $region132
          $region131: #{tpu_custom_call.1} parent=83 // pred_region
            %543 = sst [smem:[#allocation10]] [#allocation65]
            %544 = sst [smem:[#allocation11]] [#allocation64]
          $region132: #{tpu_custom_call.1} parent=83 // pred_fallthru
            _
          %546 = shalt.err (0)
          %s548 = sshll.u32 %s540, 4
          %s549 = int_to_ptr.vmem [resolvable:$true] %s548
          %551 = dma.hbm_to_vmem [thread:$0]  %s538, 16, %s549, %s353
          %s552 = sadd.s32 %s347, 12
          %s553 = sld [smem:[#allocation5 + %s552]]
          %s554 = smul.addr %s553, 16
          %s555 = scalar_lea.hbm %s1, %s554
          %s556 = sadd.s32 12, %s351
          %s557 = scalar_lea.vmem [#allocation2], %s556
          // Predicated region
          $region133: #{tpu_custom_call.1} parent=83 // pred_check
            _
          $region134: #{tpu_custom_call.1} parent=83 // pred_check_branch
            %559 = sbr.rel target = $region136
          $region135: #{tpu_custom_call.1} parent=83 // pred_region
            %560 = sst [smem:[#allocation10]] [#allocation67]
            %561 = sst [smem:[#allocation11]] [#allocation66]
          $region136: #{tpu_custom_call.1} parent=83 // pred_fallthru
            _
          %563 = shalt.err (0)
          %s565 = sshll.u32 %s557, 4
          %s566 = int_to_ptr.vmem [resolvable:$true] %s565
          %568 = dma.hbm_to_vmem [thread:$0]  %s555, 16, %s566, %s353
          %s569 = sadd.s32 %s347, 13
          %s570 = sld [smem:[#allocation5 + %s569]]
          %s571 = smul.addr %s570, 16
          %s572 = scalar_lea.hbm %s1, %s571
          %s573 = sadd.s32 13, %s351
          %s574 = scalar_lea.vmem [#allocation2], %s573
          // Predicated region
          $region137: #{tpu_custom_call.1} parent=83 // pred_check
            _
          $region138: #{tpu_custom_call.1} parent=83 // pred_check_branch
            %576 = sbr.rel target = $region140
          $region139: #{tpu_custom_call.1} parent=83 // pred_region
            %577 = sst [smem:[#allocation10]] [#allocation69]
            %578 = sst [smem:[#allocation11]] [#allocation68]
          $region140: #{tpu_custom_call.1} parent=83 // pred_fallthru
            _
          %580 = shalt.err (0)
          %s582 = sshll.u32 %s574, 4
          %s583 = int_to_ptr.vmem [resolvable:$true] %s582
          %585 = dma.hbm_to_vmem [thread:$0]  %s572, 16, %s583, %s353
          %s586 = sadd.s32 %s347, 14
          %s587 = sld [smem:[#allocation5 + %s586]]
          %s588 = smul.addr %s587, 16
          %s589 = scalar_lea.hbm %s1, %s588
          %s590 = sadd.s32 14, %s351
          %s591 = scalar_lea.vmem [#allocation2], %s590
          // Predicated region
          $region141: #{tpu_custom_call.1} parent=83 // pred_check
            _
          $region142: #{tpu_custom_call.1} parent=83 // pred_check_branch
            %593 = sbr.rel target = $region144
          $region143: #{tpu_custom_call.1} parent=83 // pred_region
            %594 = sst [smem:[#allocation10]] [#allocation71]
            %595 = sst [smem:[#allocation11]] [#allocation70]
          $region144: #{tpu_custom_call.1} parent=83 // pred_fallthru
            _
          %597 = shalt.err (0)
          %s599 = sshll.u32 %s591, 4
          %s600 = int_to_ptr.vmem [resolvable:$true] %s599
          %602 = dma.hbm_to_vmem [thread:$0]  %s589, 16, %s600, %s353
          %s603 = sadd.s32 %s347, 15
          %s604 = sld [smem:[#allocation5 + %s603]]
          %s605 = smul.addr %s604, 16
          %s606 = scalar_lea.hbm %s1, %s605
          %s607 = sadd.s32 15, %s351
          %s608 = scalar_lea.vmem [#allocation2], %s607
          // Predicated region
          $region145: #{tpu_custom_call.1} parent=83 // pred_check
            _
          $region146: #{tpu_custom_call.1} parent=83 // pred_check_branch
            %610 = sbr.rel target = $region148
          $region147: #{tpu_custom_call.1} parent=83 // pred_region
            %611 = sst [smem:[#allocation10]] [#allocation73]
            %612 = sst [smem:[#allocation11]] [#allocation72]
          $region148: #{tpu_custom_call.1} parent=83 // pred_fallthru
            _
          %614 = shalt.err (0)
          %s616 = sshll.u32 %s608, 4
          %s617 = int_to_ptr.vmem [resolvable:$true] %s616
          %619 = dma.hbm_to_vmem [thread:$0]  %s606, 16, %s617, %s353
        $region84: #{tpu_custom_call.1} parent=11 // pred_fallthru
          _
        %p620 = scmp.lt.s32.totalorder %s22, 0
        %s621 = ssub.s32 0, %s22
        %s622 = scalar_select %p620, %s621, %s22
        %s623 = sand.u32 %s622, 1
        %s624 = ssub.s32 0, %s623
        %s625 = scalar_select %p620, %s624, %s623
        %p626 = scmp.ne.s32.totalorder %s625, 0
        %p627 = scmp.lt.s32.totalorder %s625, 0
        %p628 = pnand %p627, %p626
        %p629 = pneg %p628
        %s630 = sadd.s32 %s625, 2
        %s631 = scalar_select %p629, %s630, %s625
        %s632 = scalar_lea.sflag [#allocation3], %s631
        %s633 = smul.u32 1, 1
        %s634 = sshll.u32 %s633, 4
        %635 = dma.done %s632, %s634
        %s636 = sshll.u32 %s633, 4
        %637 = dma.done %s632, %s636
        %s638 = sshll.u32 %s633, 4
        %639 = dma.done %s632, %s638
        %s640 = sshll.u32 %s633, 4
        %641 = dma.done %s632, %s640
        %s642 = sshll.u32 %s633, 4
        %643 = dma.done %s632, %s642
        %s644 = sshll.u32 %s633, 4
        %645 = dma.done %s632, %s644
        %s646 = sshll.u32 %s633, 4
        %647 = dma.done %s632, %s646
        %s648 = sshll.u32 %s633, 4
        %649 = dma.done %s632, %s648
        %s650 = sshll.u32 %s633, 4
        %651 = dma.done %s632, %s650
        %s652 = sshll.u32 %s633, 4
        %653 = dma.done %s632, %s652
        %s654 = sshll.u32 %s633, 4
        %655 = dma.done %s632, %s654
        %s656 = sshll.u32 %s633, 4
        %657 = dma.done %s632, %s656
        %s658 = sshll.u32 %s633, 4
        %659 = dma.done %s632, %s658
        %s660 = sshll.u32 %s633, 4
        %661 = dma.done %s632, %s660
        %s662 = sshll.u32 %s633, 4
        %663 = dma.done %s632, %s662
        %s664 = sshll.u32 %s633, 4
        %665 = dma.done %s632, %s664
        %s666 = smul.u32 %s631, 16
        %s667 = scalar_lea.vmem [#allocation2], %s666
        %v668 = vld [vmem:[%s667] sm:$0xff]
        %v669 = vld [vmem:[%s667 + $0x8] sm:$0xff]
        %v670 = vrot.slane %v668, 4
        %v671 = vadd.f32 %v668, %v670
        %v672 = vrot.slane %v671, 2
        %v673 = vadd.f32 %v671, %v672
        %v674 = vrot.slane %v673, 1
        %v675 = vadd.f32 %v673, %v674
        %v676 = vrot.slane %v669, 4
        %v677 = vadd.f32 %v669, %v676
        %v678 = vrot.slane %v677, 2
        %v679 = vadd.f32 %v677, %v678
        %v680 = vrot.slane %v679, 1
        %v681 = vadd.f32 %v679, %v680
        %v682 = vmul.f32 %v675, 0.125
        %v683 = vmul.f32 %v681, 0.125
        %vm686 = vcmask 1041409
        %v687 = vsel %vm686, %v683, %v682
        %689 = vst [vmem:[%s65] sm:$0x3] %v687
        %s690 = sand.u32 %s38, 1
        %s691 = scalar_lea.sflag [#allocation7], %s690
        %s692 = sand.u32 %s38, 1
        %s693 = smul.addr %s692, 2
        %s694 = scalar_lea.vmem [#allocation6], %s693
        // Predicated region
        $region149: #{tpu_custom_call.1} parent=11 // pred_check
          %p695 = pneg %p44
        $region150: #{tpu_custom_call.1} parent=11 // pred_check_branch
          %697 = sbr.rel (%p695) target = $region152
        $region151: #{tpu_custom_call.1} parent=11 // pred_region
          %s698 = smul.u32 %s21, 2
          %s699 = sadd.s32 %s698, %s22
          %s701 = ssub.s32 32, 32
          %702 = vsyncadd %s691, %s701
          %s703 = smul.addr %s699, 32
          %s704 = scalar_lea.hbm %s2, %s703
          %s706 = sshll.u32 %s694, 4
          %s707 = int_to_ptr.vmem [resolvable:$true] %s706
          %709 = dma.vmem_to_hbm [thread:$0]  %s707, 32, %s704, %s691
        $region152: #{tpu_custom_call.1} parent=11 // pred_fallthru
          _
      $region12: #{tpu_custom_call.1} parent=5 // pred_fallthru
        _
      %p710 = scmp.le.s32.totalorder 1, %s15
      // Predicated region
      $region153: #{tpu_custom_call.1} parent=5 // pred_check
        %p711 = pneg %p710
      $region154: #{tpu_custom_call.1} parent=5 // pred_check_branch
        %713 = sbr.rel (%p711) target = $region156
      $region155: #{tpu_custom_call.1} parent=5 // pred_region
        %s714 = ssub.s32 %s15, 1
        // Predicated region
        $region157: #{tpu_custom_call.1} parent=155 // pred_check
          %p715 = pneg %p50
        $region158: #{tpu_custom_call.1} parent=155 // pred_check_branch
          %717 = sbr.rel (%p715) target = $region160
        $region159: #{tpu_custom_call.1} parent=155 // pred_region
          %s718 = sand.u32 %s41, 1
          %s719 = scalar_lea.sflag [#allocation7], %s718
          %s720 = sand.u32 %s41, 1
          %s721 = smul.addr %s720, 2
          %s722 = scalar_lea.vmem [#allocation6], %s721
          %723 = dma.done %s719, 32
        $region160: #{tpu_custom_call.1} parent=155 // pred_fallthru
          _
      $region156: #{tpu_custom_call.1} parent=5 // pred_fallthru
        _
    $region6: #{tpu_custom_call.1} parent=1 // loop_footer
      %s19 = sadd.s32 1, %s15
    $region7: #{tpu_custom_call.1} parent=1 // loop_footer_branch
      %14 = sbr.rel target = $region3
    $region8: #{tpu_custom_call.1} parent=1 // loop_exit
      _
    %724 = vsyncpa [#allocation7], 1
    %s725 = scalar_lea.sflag [#allocation7], 1
    %726 = vsyncpa %s725, 1
  %727 = vsyncmov [#allocation3]
  %s728 = vpop.sfrf %727
  %p729 = scmp.eq.s32.totalorder %s728, 0
  %p730 = pneg %p729
  %732 = shalt.err (%p730)
  %s733 = scalar_lea.sflag [#allocation3], 1
  %734 = vsyncmov %s733
  %s735 = vpop.sfrf %734
  %p736 = scmp.eq.s32.totalorder %s735, 0
  %p737 = pneg %p736
  %739 = shalt.err (%p737)

</llo_original>
